<compile_context>
chip_gen: v6e
topology: v6e:2x2x1
jax: 0.10.0
libtpu: 0.0.40
codegen_flags: <defaults>
</compile_context>

<pallas_src>
import functools

import jax
import jax.numpy as jnp
from jax.experimental import pallas as pl
from jax.experimental.pallas import tpu as pltpu


def _self_attention_kernel(x_tile_ref, k_ref, wqv_ref, bqv_ref, wo_ref, bo_ref,
                           o_ref, *, hw, use_bf16_exp):
    t = pl.program_id(1)
    n_t = pl.num_programs(1)
    ckp = k_ref.shape[1]            # padded query/key channel count (multiple of 8)
    tq = x_tile_ref.shape[2]
    hw_pad = k_ref.shape[2]

    @pl.when(t == 0)
    def _init():
        o_ref[...] = jnp.zeros_like(o_ref)

    # Fused Q/V projection on the current query tile (bf16 MXU, f32 accumulation).
    qv = jnp.dot(wqv_ref[...], x_tile_ref[0],
                 preferred_element_type=jnp.float32) + bqv_ref[...]
    q = qv[:ckp, :]                 # (CKP, TQ); padded rows are exactly zero
    v = qv[ckp:, :]                 # (C,   TQ)

    # scores[p, j] = <q_p, k_j>  -> (TQ, HW_pad); contract the channel axis of both.
    scores = jax.lax.dot_general(
        q.astype(jnp.bfloat16), k_ref[0],
        dimension_numbers=(((0,), (0,)), ((), ())),
        preferred_element_type=jnp.float32)

    if hw_pad != hw:
        # Padded key columns must not receive softmax mass.
        key_idx = jax.lax.broadcasted_iota(jnp.int32, scores.shape, 1)
        scores = jnp.where(key_idx < hw, scores, -jnp.inf)
        # Padded query positions must not contribute to the V @ att contraction
        # (their V column would otherwise equal the bias bv, not zero).
        q_idx = t * tq + jax.lax.broadcasted_iota(jnp.int32, v.shape, 1)
        v = jnp.where(q_idx < hw, v, 0.0)

    # Softmax over keys (last axis).
    centered = scores - jnp.max(scores, axis=-1, keepdims=True)   # values in (-inf, 0]
    if use_bf16_exp:                # v6e/v7x: bf16 EUP exp (~2x), f32 row sums
        e = jnp.exp(centered.astype(jnp.bfloat16))
        denom = jnp.sum(e.astype(jnp.float32), axis=-1, keepdims=True)
        att = (e.astype(jnp.float32)
               * pl.reciprocal(denom, approx=True)).astype(jnp.bfloat16)
    else:                           # v5e: no bf16 VPU/EUP -> keep f32 softmax math
        e = jnp.exp(centered)
        att = (e * pl.reciprocal(jnp.sum(e, axis=-1, keepdims=True),
                                 approx=True)).astype(jnp.bfloat16)

    # attention_output[c, i] += sum_{p in tile} v[c, p] * att[p, i]  (no att.T copy);
    # the resident f32 output block doubles as the accumulator.
    o_ref[0] += jax.lax.dot_general(
        v.astype(jnp.bfloat16), att,
        dimension_numbers=(((1,), (0,)), ((), ())),
        preferred_element_type=jnp.float32)

    @pl.when(t == n_t - 1)
    def _finalize():
        out = jnp.dot(wo_ref[...], o_ref[0],
                      preferred_element_type=jnp.float32) + bo_ref[...]
        o_ref[0] = out.astype(o_ref.dtype)


def _tpu_flags():
    """Returns (is_pre_v6, vmem_capacity_bytes) with safe fallbacks."""
    pre_v6 = True        # conservative default: f32 exp + tq=128 are correct anywhere
    cap = 64 * 1024 * 1024
    try:
        kind = jax.devices()[0].device_kind.lower()
        pre_v6 = any(tag in kind for tag in ("v2", "v3", "v4", "v5"))
    except Exception:
        pass
    try:
        cap = int(getattr(pltpu.get_tpu_info(), "vmem_capacity_bytes", cap))
    except Exception:
        pass
    return pre_v6, cap


def self_attention_pallas(x_nchw, params, *, tq=None):
    """x_nchw: (B, C, H, W) float32.  params: PyTorch-convention conv weights
    (C_out, C_in, 1, 1) and biases (C_out,)."""
    B, C, H, W = x_nchw.shape
    HW = H * W
    HW_pad = ((HW + 127) // 128) * 128
    Ck = params["wq"].shape[0]                     # in_channels // 8
    CKP = max(8, ((Ck + 7) // 8) * 8)              # pad Q/K channels to sublane granule

    pre_v6, vmem_cap = _tpu_flags()
    if tq is None:
        tq = 256 if (not pre_v6 and HW_pad % 256 == 0) else 128
    if HW_pad % tq != 0 or tq % 128 != 0:
        tq = 128
    tq = min(tq, HW_pad)
    n_t = HW_pad // tq
    use_bf16_exp = not pre_v6

    # NCHW -> channel-major (B, C, HW): pure reshape, then lane-pad HW to 128.
    x_cm = x_nchw.reshape(B, C, HW).astype(jnp.float32)
    if HW_pad != HW:
        x_cm = jnp.pad(x_cm, ((0, 0), (0, 0), (0, HW_pad - HW)))
    x_bf16 = x_cm.astype(jnp.bfloat16)

    def _wmat(w):                                  # (Cout, Cin, 1, 1) -> (Cout, Cin)
        return w[:, :, 0, 0].astype(jnp.float32)

    wq, wk = _wmat(params["wq"]), _wmat(params["wk"])
    wv, wo = _wmat(params["wv"]), _wmat(params["wo"])

    # Padded Wq rows / bq entries MUST stay exactly zero so the CKP padding contributes
    # nothing to the scores -- guaranteed by zero-initialized construction below.
    wq_p = jnp.zeros((CKP, C), jnp.float32).at[:Ck].set(wq)
    bq_p = jnp.zeros((CKP, 1), jnp.float32).at[:Ck, 0].set(params["bq"].astype(jnp.float32))

    wqv = jnp.concatenate([wq_p, wv], axis=0).astype(jnp.bfloat16)        # (CKP+C, C) bf16
    bqv = jnp.concatenate(
        [bq_p, params["bv"].reshape(C, 1).astype(jnp.float32)], axis=0)   # (CKP+C, 1) f32
    bo = params["bo"].reshape(C, 1).astype(jnp.float32)

    # Precompute K = Wk @ x + bk once in XLA (bf16, channel-padded): removes the
    # duplicate full-x DMA and the in-kernel f32 K matmul from the hot loop.
    k_full = (jnp.einsum("oc,bcj->boj", wk, x_cm)
              + params["bk"].astype(jnp.float32)[None, :, None])          # (B, Ck, HW_pad)
    k_p = jnp.zeros((B, CKP, HW_pad), jnp.bfloat16).at[:, :Ck, :].set(
        k_full.astype(jnp.bfloat16))

    # VMEM budget: pipelined blocks (x2 buffers) + resident output + softmax temps.
    bytes_needed = (
        2 * (C * tq * 2)                           # x query tiles (bf16, double-buffered)
        + 2 * (CKP * HW_pad * 2)                   # K block (bf16)
        + 2 * (C * HW_pad * 4)                     # resident f32 output/accumulator block
        + 2 * ((CKP + C) * C * 2 + (CKP + C) * 4 + C * C * 4 + C * 4)   # weights/biases
        + 3 * (tq * HW_pad * 4)                    # scores / softmax temporaries headroom
    )
    vmem_limit = int(min(max(2 * bytes_needed, 32 * 1024 * 1024),
                         int(0.85 * vmem_cap)))

    const = lambda shape: pl.BlockSpec(shape, lambda b, t: tuple(0 for _ in shape))
    kernel = functools.partial(_self_attention_kernel, hw=HW, use_bf16_exp=use_bf16_exp)

    out_cm = pl.pallas_call(
        kernel,
        out_shape=jax.ShapeDtypeStruct((B, C, HW_pad), jnp.float32),
        grid_spec=pltpu.PrefetchScalarGridSpec(
            num_scalar_prefetch=0,
            grid=(B, n_t),
            in_specs=[
                pl.BlockSpec((1, C, tq), lambda b, t: (b, 0, t)),        # x query tile
                pl.BlockSpec((1, CKP, HW_pad), lambda b, t: (b, 0, 0)),  # K, per-batch resident
                const((CKP + C, C)), const((CKP + C, 1)),                # fused Wq|Wv, bq|bv
                const((C, C)), const((C, 1)),                            # Wo, bo
            ],
            out_specs=pl.BlockSpec((1, C, HW_pad), lambda b, t: (b, 0, 0)),
        ),
        compiler_params=pltpu.CompilerParams(
            dimension_semantics=("parallel", "arbitrary"),
            vmem_limit_bytes=vmem_limit,
        ),
    )(x_bf16, k_p, wqv, bqv, wo, bo)

    # TODO(synk): on v7x (2 TensorCores) with B < 2 the batch-parallel axis leaves one
    # core idle; a per-core query-range split with a partial-sum epilogue would fix it.
    # TODO(synk): for HW >~ 8-16K add a second-level key tiling (online/flash softmax)
    # so the (TQ, HW) scores tile and resident (C, HW) output stay within v7x's 64 MiB.

    return out_cm[:, :, :HW].reshape(B, C, H, W)


def self_attention_reference(x_nchw, params):
    """Pure-JAX f32 reference mirroring the PyTorch forward exactly (NCHW)."""
    B, C, H, W = x_nchw.shape
    HW = H * W

    def conv1x1(x, w, b):
        y = jnp.einsum("bchw,oc->bohw", x, w[:, :, 0, 0])
        return y + b[None, :, None, None]

    q = conv1x1(x_nchw, params["wq"], params["bq"]).reshape(B, -1, HW).transpose(0, 2, 1)
    k = conv1x1(x_nchw, params["wk"], params["bk"]).reshape(B, -1, HW)
    v = conv1x1(x_nchw, params["wv"], params["bv"]).reshape(B, -1, HW)
    scores = jax.nn.softmax(jnp.einsum("bic,bcj->bij", q, k), axis=-1)
    attn_out = jnp.einsum("bcj,bji->bci", v, scores).reshape(B, C, H, W)
    return conv1x1(attn_out, params["wo"], params["bo"])


if __name__ == "__main__":
    key = jax.random.PRNGKey(0)

    def make_params(k, C):
        Ck = max(1, C // 8)
        ks = jax.random.split(k, 8)
        s = 0.1
        return {
            "wq": s * jax.random.normal(ks[0], (Ck, C, 1, 1), jnp.float32),
            "bq": s * jax.random.normal(ks[1], (Ck,), jnp.float32),
            "wk": s * jax.random.normal(ks[2], (Ck, C, 1, 1), jnp.float32),
            "bk": s * jax.random.normal(ks[3], (Ck,), jnp.float32),
            "wv": s * jax.random.normal(ks[4], (C, C, 1, 1), jnp.float32),
            "bv": s * jax.random.normal(ks[5], (C,), jnp.float32),
            "wo": s * jax.random.normal(ks[6], (C, C, 1, 1), jnp.float32),
            "bo": s * jax.random.normal(ks[7], (C,), jnp.float32),
        }

    # Second shape (H=W=9 -> HW=81) exercises the lane-padding + key/query masking path.
    for (B, C, H, W) in [(2, 16, 16, 16), (1, 16, 9, 9)]:
        kp, kx, key = jax.random.split(key, 3)
        params = make_params(kp, C)
        x = jax.random.normal(kx, (B, C, H, W), jnp.float32)

        out = jax.block_until_ready(self_attention_pallas(x, params))
        ref = jax.block_until_ready(self_attention_reference(x, params))

        assert out.shape == (B, C, H, W)
        # Tolerance covers bf16 MXU operands, bf16 exp (v6e/v7x) and the EUP
        # approximate reciprocal in the softmax denominator.
        max_diff = jnp.max(jnp.abs(out - ref))
        assert jnp.allclose(out, ref, atol=2e-2, rtol=2e-2), \
            f"shape {(B, C, H, W)}: max abs diff {max_diff}"

    print("KERNEL_OK")
</pallas_src>

<mosaic_0001>
module attributes {stable_mosaic.version = 11 : i64} {
  func.func @_self_attention_kernel(%arg0: i32, %arg1: i32, %arg2: memref<1x16x256xbf16, #tpu.memory_space<vmem>>, %arg3: memref<1x8x256xbf16, #tpu.memory_space<vmem>>, %arg4: memref<24x16xbf16, #tpu.memory_space<vmem>>, %arg5: memref<24x1xf32, #tpu.memory_space<vmem>>, %arg6: memref<16x16xf32, #tpu.memory_space<vmem>>, %arg7: memref<16x1xf32, #tpu.memory_space<vmem>>, %arg8: memref<1x16x256xf32, #tpu.memory_space<vmem>>) attributes {dimension_semantics = [#tpu.dimension_semantics<parallel>, #tpu.dimension_semantics<arbitrary>], iteration_bounds = array<i64: 2, 1>, scalar_prefetch = 0 : i64, scratch_operands = 0 : i64, tpu.core_type = #tpu.core_type<tc>, window_params = [{transform_indices = @transform_0, window_bounds = array<i64: 1, 16, 256>}, {transform_indices = @transform_1, window_bounds = array<i64: 1, 8, 256>}, {pipeline_mode = #tpu.pipeline_mode<synchronous>, transform_indices = @transform_2, window_bounds = array<i64: 24, 16>}, {pipeline_mode = #tpu.pipeline_mode<synchronous>, transform_indices = @transform_3, window_bounds = array<i64: 24, 1>}, {pipeline_mode = #tpu.pipeline_mode<synchronous>, transform_indices = @transform_4, window_bounds = array<i64: 16, 16>}, {pipeline_mode = #tpu.pipeline_mode<synchronous>, transform_indices = @transform_5, window_bounds = array<i64: 16, 1>}, {transform_indices = @transform_6, window_bounds = array<i64: 1, 16, 256>}]} {
    %c0_i32 = arith.constant 0 : i32
    %0 = arith.cmpi eq, %arg1, %c0_i32 : i32
    %1 = arith.extui %0 : i1 to i32
    %c0_i32_0 = arith.constant 0 : i32
    %2 = arith.cmpi ne, %1, %c0_i32_0 : i32
    scf.if %2 {
      %cst_22 = arith.constant 0.000000e+00 : f32
      %41 = vector.broadcast %cst_22 : f32 to vector<1x16x256xf32>
      %c0_23 = arith.constant 0 : index
      %c0_24 = arith.constant 0 : index
      %c0_25 = arith.constant 0 : index
      %42 = vector.load %arg8[%c0_23, %c0_24, %c0_25] : memref<1x16x256xf32, #tpu.memory_space<vmem>>, vector<1x16x256xf32>
      tpu.vector_store %arg8[%c0_23, %c0_24, %c0_25], %41 {strides = array<i32>} : memref<1x16x256xf32, #tpu.memory_space<vmem>>, vector<1x16x256xf32>,
    } else {
    }
    %c0 = arith.constant 0 : index
    %c0_1 = arith.constant 0 : index
    %3 = vector.load %arg4[%c0, %c0_1] : memref<24x16xbf16, #tpu.memory_space<vmem>>, vector<24x16xbf16>
    %c0_2 = arith.constant 0 : index
    %c0_3 = arith.constant 0 : index
    %c0_4 = arith.constant 0 : index
    %4 = vector.load %arg2[%c0_2, %c0_3, %c0_4] : memref<1x16x256xbf16, #tpu.memory_space<vmem>>, vector<1x16x256xbf16>
    %5 = vector.shape_cast %4 : vector<1x16x256xbf16> to vector<16x256xbf16>
    %cst = arith.constant dense<0.000000e+00> : vector<24x256xf32>
    %6 = tpu.matmul %3, %5, %cst {dimension_numbers = #tpu.dot_dimension_numbers<[1], [0], [0], [1], [0, 0, 1, 1], [], []>} : vector<24x16xbf16>, vector<16x256xbf16>, vector<24x256xf32> -> vector<24x256xf32>
    %c0_5 = arith.constant 0 : index
    %c0_6 = arith.constant 0 : index
    %7 = vector.load %arg5[%c0_5, %c0_6] : memref<24x1xf32, #tpu.memory_space<vmem>>, vector<24x1xf32>
    %8 = vector.broadcast %7 : vector<24x1xf32> to vector<24x256xf32>
    %9 = arith.addf %6, %8 : vector<24x256xf32>
    %10 = vector.extract_strided_slice %9 {offsets = [0, 0], sizes = [8, 256], strides = [1, 1]} : vector<24x256xf32> to vector<8x256xf32>
    %11 = vector.extract_strided_slice %9 {offsets = [8, 0], sizes = [16, 256], strides = [1, 1]} : vector<24x256xf32> to vector<16x256xf32>
    %12 = arith.truncf %10 : vector<8x256xf32> to vector<8x256xbf16>
    %c0_7 = arith.constant 0 : index
    %c0_8 = arith.constant 0 : index
    %c0_9 = arith.constant 0 : index
    %13 = vector.load %arg3[%c0_7, %c0_8, %c0_9] : memref<1x8x256xbf16, #tpu.memory_space<vmem>>, vector<1x8x256xbf16>
    %14 = vector.shape_cast %13 : vector<1x8x256xbf16> to vector<8x256xbf16>
    %cst_10 = arith.constant dense<0.000000e+00> : vector<256x256xf32>
    %15 = tpu.matmul %12, %14, %cst_10 {dimension_numbers = #tpu.dot_dimension_numbers<[0], [0], [1], [1], [0, 1, 1, 1], [], []>} : vector<8x256xbf16>, vector<8x256xbf16>, vector<256x256xf32> -> vector<256x256xf32>
    %cst_11 = arith.constant dense<0xFF800000> : vector<256xf32>
    %16 = vector.multi_reduction <maximumf>, %15, %cst_11 [1] : vector<256x256xf32> to vector<256xf32>
    %17 = vector.shape_cast %16 : vector<256xf32> to vector<256x1xf32>
    %18 = vector.broadcast %17 : vector<256x1xf32> to vector<256x256xf32>
    %19 = arith.subf %15, %18 : vector<256x256xf32>
    %20 = arith.truncf %19 : vector<256x256xf32> to vector<256x256xbf16>
    %21 = math.exp %20 : vector<256x256xbf16>
    %22 = arith.extf %21 : vector<256x256xbf16> to vector<256x256xf32>
    %cst_12 = arith.constant dense<0.000000e+00> : vector<256xf32>
    %23 = vector.multi_reduction <add>, %22, %cst_12 [1] : vector<256x256xf32> to vector<256xf32>
    %24 = vector.shape_cast %23 : vector<256xf32> to vector<256x1xf32>
    %25 = arith.extf %21 : vector<256x256xbf16> to vector<256x256xf32>
    %26 = tpu.reciprocal %24 {approx = true} : vector<256x1xf32> -> vector<256x1xf32>
    %27 = vector.broadcast %26 : vector<256x1xf32> to vector<256x256xf32>
    %28 = arith.mulf %25, %27 : vector<256x256xf32>
    %29 = arith.truncf %28 : vector<256x256xf32> to vector<256x256xbf16>
    %c0_13 = arith.constant 0 : index
    %c0_14 = arith.constant 0 : index
    %c0_15 = arith.constant 0 : index
    %30 = vector.load %arg8[%c0_13, %c0_14, %c0_15] : memref<1x16x256xf32, #tpu.memory_space<vmem>>, vector<1x16x256xf32>
    %31 = vector.shape_cast %30 : vector<1x16x256xf32> to vector<16x256xf32>
    %32 = arith.truncf %11 : vector<16x256xf32> to vector<16x256xbf16>
    %cst_16 = arith.constant dense<0.000000e+00> : vector<16x256xf32>
    %33 = tpu.matmul %32, %29, %cst_16 {dimension_numbers = #tpu.dot_dimension_numbers<[1], [0], [0], [1], [0, 0, 1, 1], [], []>} : vector<16x256xbf16>, vector<256x256xbf16>, vector<16x256xf32> -> vector<16x256xf32>
    %34 = arith.addf %31, %33 : vector<16x256xf32>
    %c0_17 = arith.constant 0 : index
    %c0_18 = arith.constant 0 : index
    %c0_19 = arith.constant 0 : index
    %35 = vector.load %arg8[%c0_17, %c0_18, %c0_19] : memref<1x16x256xf32, #tpu.memory_space<vmem>>, vector<1x16x256xf32>
    %36 = vector.shape_cast %35 : vector<1x16x256xf32> to vector<16x256xf32>
    %37 = vector.shape_cast %34 : vector<16x256xf32> to vector<1x16x256xf32>
    tpu.vector_store %arg8[%c0_17, %c0_18, %c0_19], %37 {strides = array<i32>} : memref<1x16x256xf32, #tpu.memory_space<vmem>>, vector<1x16x256xf32>,
    %c0_i32_20 = arith.constant 0 : i32
    %38 = arith.cmpi eq, %arg1, %c0_i32_20 : i32
    %39 = arith.extui %38 : i1 to i32
    %c0_i32_21 = arith.constant 0 : i32
    %40 = arith.cmpi ne, %39, %c0_i32_21 : i32
    scf.if %40 {
      %c0_22 = arith.constant 0 : index
      %c0_23 = arith.constant 0 : index
      %41 = vector.load %arg6[%c0_22, %c0_23] : memref<16x16xf32, #tpu.memory_space<vmem>>, vector<16x16xf32>
      %c0_24 = arith.constant 0 : index
      %c0_25 = arith.constant 0 : index
      %c0_26 = arith.constant 0 : index
      %42 = vector.load %arg8[%c0_24, %c0_25, %c0_26] : memref<1x16x256xf32, #tpu.memory_space<vmem>>, vector<1x16x256xf32>
      %43 = vector.shape_cast %42 : vector<1x16x256xf32> to vector<16x256xf32>
      %cst_27 = arith.constant dense<0.000000e+00> : vector<16x256xf32>
      %44 = tpu.matmul %41, %43, %cst_27 {dimension_numbers = #tpu.dot_dimension_numbers<[1], [0], [0], [1], [0, 0, 1, 1], [], []>} : vector<16x16xf32>, vector<16x256xf32>, vector<16x256xf32> -> vector<16x256xf32>
      %c0_28 = arith.constant 0 : index
      %c0_29 = arith.constant 0 : index
      %45 = vector.load %arg7[%c0_28, %c0_29] : memref<16x1xf32, #tpu.memory_space<vmem>>, vector<16x1xf32>
      %46 = vector.broadcast %45 : vector<16x1xf32> to vector<16x256xf32>
      %47 = arith.addf %44, %46 : vector<16x256xf32>
      %c0_30 = arith.constant 0 : index
      %c0_31 = arith.constant 0 : index
      %c0_32 = arith.constant 0 : index
      %48 = vector.load %arg8[%c0_30, %c0_31, %c0_32] : memref<1x16x256xf32, #tpu.memory_space<vmem>>, vector<1x16x256xf32>
      %49 = vector.shape_cast %48 : vector<1x16x256xf32> to vector<16x256xf32>
      %50 = vector.shape_cast %47 : vector<16x256xf32> to vector<1x16x256xf32>
      tpu.vector_store %arg8[%c0_30, %c0_31, %c0_32], %50 {strides = array<i32>} : memref<1x16x256xf32, #tpu.memory_space<vmem>>, vector<1x16x256xf32>,
    } else {
    }
    return
  }
  func.func @transform_0(%arg0: i32, %arg1: i32) -> (i32, i32, i32) {
    %c0_i32 = arith.constant 0 : i32
    %c0_i32_0 = arith.constant 0 : i32
    return %arg0, %c0_i32, %arg1 : i32, i32, i32
  }
  func.func @transform_1(%arg0: i32, %arg1: i32) -> (i32, i32, i32) {
    %c0_i32 = arith.constant 0 : i32
    %c0_i32_0 = arith.constant 0 : i32
    %c0_i32_1 = arith.constant 0 : i32
    return %arg0, %c0_i32, %c0_i32_0 : i32, i32, i32
  }
  func.func @transform_2(%arg0: i32, %arg1: i32) -> (i32, i32) {
    %c0_i32 = arith.constant 0 : i32
    %c0_i32_0 = arith.constant 0 : i32
    %c0_i32_1 = arith.constant 0 : i32
    return %c0_i32, %c0_i32_0 : i32, i32
  }
  func.func @transform_3(%arg0: i32, %arg1: i32) -> (i32, i32) {
    %c0_i32 = arith.constant 0 : i32
    %c0_i32_0 = arith.constant 0 : i32
    %c0_i32_1 = arith.constant 0 : i32
    return %c0_i32, %c0_i32_0 : i32, i32
  }
  func.func @transform_4(%arg0: i32, %arg1: i32) -> (i32, i32) {
    %c0_i32 = arith.constant 0 : i32
    %c0_i32_0 = arith.constant 0 : i32
    %c0_i32_1 = arith.constant 0 : i32
    return %c0_i32, %c0_i32_0 : i32, i32
  }
  func.func @transform_5(%arg0: i32, %arg1: i32) -> (i32, i32) {
    %c0_i32 = arith.constant 0 : i32
    %c0_i32_0 = arith.constant 0 : i32
    %c0_i32_1 = arith.constant 0 : i32
    return %c0_i32, %c0_i32_0 : i32, i32
  }
  func.func @transform_6(%arg0: i32, %arg1: i32) -> (i32, i32, i32) {
    %c0_i32 = arith.constant 0 : i32
    %c0_i32_0 = arith.constant 0 : i32
    %c0_i32_1 = arith.constant 0 : i32
    return %arg0, %c0_i32, %c0_i32_0 : i32, i32, i32
  }
}

</mosaic_0001>

<llo_original>
// kernel: tpu_custom_call.1
$region0: #{tpu_custom_call.1}
  #allocation0 [shape = 'u32[]', space=smem, size = 0x4, offset = 0x4, fixed_abs, tag = 'smem constant byte address 0x4 - core index']
  #allocation1 [shape = 'u32[144,128]{1,0:T(1,128)}', space=vmem, size = 0x12000, scoped, tag = 'internal scratch']
  %s0 = inlined_call_operand.vmem [shape: bf16[2,16,256], index: 0, kind: input, shape index: {}]
  %s1 = inlined_call_operand.vmem [shape: bf16[2,8,256], index: 1, kind: input, shape index: {}]
  %s2 = inlined_call_operand.vmem [shape: bf16[24,16], index: 2, kind: input, shape index: {}]
  %s3 = inlined_call_operand.vmem [shape: f32[24,1], index: 3, kind: input, shape index: {}]
  %s4 = inlined_call_operand.vmem [shape: f32[16,16], index: 4, kind: input, shape index: {}]
  %s5 = inlined_call_operand.vmem [shape: f32[16,1], index: 5, kind: input, shape index: {}]
  %s6 = inlined_call_operand.hbm [shape: f32[2,16,256], index: 6, kind: output, shape index: {}]
  %s7 = sld [smem:[#allocation0]]
  $region65: #{tpu_custom_call.1} parent=0
    _
  %s9 = ssub.s32 1, %s7
  %s10 = scalar_select 0, %s9, %s7
  $region1: #{tpu_custom_call.1} parent=0
    #allocation2 [shape = 'u8[32768]{0}', space=vmem, size = 0x8000, scoped, tag = 'output window, operand 0']
    #allocation3 [shape = 's32[2]{0}', space=sflag, size = 0x8, scoped, tag = 'scoped memory for tpu_custom_call.1']
    %11 = vsyncpa [#allocation3], 0
    %s12 = scalar_lea.sflag [#allocation3], 1
    %13 = vsyncpa %s12, 0
    loop: start=0, step=1, limit=4
    $region2: #{tpu_custom_call.1} parent=1 // loop_pre_header
      _
    $region3: #{tpu_custom_call.1} parent=1 // loop_header
      %s15 = sphi 0, %s19
      %p16 = scmp.ge.s32.totalorder %s15, 4
      %s22 = sphi 0, %s34
      %s23 = sphi 0, %s30
      %s24 = sphi 0, %s22
      %s25 = sphi 0, %s23
      %s26 = sphi 0, %s24
      %s27 = sphi 0, %s25
      %s39 = sphi 0, %s41
      %s42 = sphi 0, %s39
      %s43 = sphi 0, %s42
      %s59 = sphi 0, %s43
      %s65 = sphi 0, %s67
      %s68 = sphi 0, %s65
      %s69 = sphi 0, %s68
      %s85 = sphi 0, %s69
      %s89 = sphi 0, %s89
      %s91 = sphi 0, %s89
      %s92 = sphi 0, %s91
      %s106 = sphi 0, %s92
      %s110 = sphi 0, %s110
      %s112 = sphi 0, %s110
      %s113 = sphi 0, %s112
      %s127 = sphi 0, %s113
      %s131 = sphi 0, %s131
      %s133 = sphi 0, %s131
      %s134 = sphi 0, %s133
      %s148 = sphi 0, %s134
      %s152 = sphi 0, %s152
      %s154 = sphi 0, %s152
      %s155 = sphi 0, %s154
      %s169 = sphi 0, %s155
      %s175 = sphi 0, %s177
      %s178 = sphi 0, %s175
      %s179 = sphi 0, %s178
      %s195 = sphi 0, %s179
    $region4: #{tpu_custom_call.1} parent=1 // loop_header_branch
      %18 = sbr.rel (%p16) target = $region8
    $region5: #{tpu_custom_call.1} parent=1 // loop_body
      %s20 = ssub.s32 %s15, 1
      %s21 = ssub.s32 %s15, 2
      %s28 = sadd.s32 1, %s23
      %p29 = scmp.ge.s32.totalorder %s28, 1
      %s30 = scalar_select %p29, 0, %s28
      %s31 = sadd.s32 1, %s22
      %s32 = scalar_select %p29, %s31, %s22
      %p33 = scmp.ge.s32.totalorder %s32, 2
      %s34 = scalar_select %p33, 0, %s32
      %s35 = ssub.s32 %s22, %s34
      %s36 = ssub.s32 %s23, %s30
      %s37 = sor.u32 %s35, %s36
      %p38 = scmp.eq.s32.totalorder %s37, 0
      %s40 = sadd.s32 %s39, 1
      %s41 = scalar_select %p38, %s39, %s40
      %p44 = pneg %p38
      %p45 = scmp.eq.s32.totalorder %s15, 1
      %p46 = por %p44, %p45
      %p47 = scmp.ne.s32.totalorder %s39, %s42
      %p48 = scmp.eq.s32.totalorder %s15, 0
      %p49 = por %p47, %p48
      %p50 = scmp.ne.s32.totalorder %s39, %s42
      %p51 = scmp.eq.s32.totalorder %s20, 1
      %p52 = por %p50, %p51
      %p53 = scmp.ne.s32.totalorder %s42, %s43
      %p54 = scmp.eq.s32.totalorder %s20, 0
      %p55 = por %p53, %p54
      %p56 = scmp.ne.s32.totalorder %s42, %s43
      %p57 = scmp.eq.s32.totalorder %s21, 1
      %p58 = por %p56, %p57
      %p60 = scmp.ne.s32.totalorder %s43, %s59
      %p61 = scmp.eq.s32.totalorder %s21, 0
      %p62 = por %p60, %p61
      %s63 = ssub.s32 %s22, %s34
      %p64 = scmp.eq.s32.totalorder %s63, 0
      %s66 = sadd.s32 %s65, 1
      %s67 = scalar_select %p64, %s65, %s66
      %p70 = pneg %p64
      %p71 = scmp.eq.s32.totalorder %s15, 1
      %p72 = por %p70, %p71
      %p73 = scmp.ne.s32.totalorder %s65, %s68
      %p74 = scmp.eq.s32.totalorder %s15, 0
      %p75 = por %p73, %p74
      %p76 = scmp.ne.s32.totalorder %s65, %s68
      %p77 = scmp.eq.s32.totalorder %s20, 1
      %p78 = por %p76, %p77
      %p79 = scmp.ne.s32.totalorder %s68, %s69
      %p80 = scmp.eq.s32.totalorder %s20, 0
      %p81 = por %p79, %p80
      %p82 = scmp.ne.s32.totalorder %s68, %s69
      %p83 = scmp.eq.s32.totalorder %s21, 1
      %p84 = por %p82, %p83
      %p86 = scmp.ne.s32.totalorder %s69, %s85
      %p87 = scmp.eq.s32.totalorder %s21, 0
      %p88 = por %p86, %p87
      %s90 = sadd.s32 %s89, 1
      %p93 = scmp.eq.s32.totalorder %s15, 1
      %p94 = scmp.ne.s32.totalorder %s89, %s91
      %p95 = scmp.eq.s32.totalorder %s15, 0
      %p96 = por %p94, %p95
      %p97 = scmp.ne.s32.totalorder %s89, %s91
      %p98 = scmp.eq.s32.totalorder %s20, 1
      %p99 = por %p97, %p98
      %p100 = scmp.ne.s32.totalorder %s91, %s92
      %p101 = scmp.eq.s32.totalorder %s20, 0
      %p102 = por %p100, %p101
      %p103 = scmp.ne.s32.totalorder %s91, %s92
      %p104 = scmp.eq.s32.totalorder %s21, 1
      %p105 = por %p103, %p104
      %p107 = scmp.ne.s32.totalorder %s92, %s106
      %p108 = scmp.eq.s32.totalorder %s21, 0
      %p109 = por %p107, %p108
      %s111 = sadd.s32 %s110, 1
      %p114 = scmp.eq.s32.totalorder %s15, 1
      %p115 = scmp.ne.s32.totalorder %s110, %s112
      %p116 = scmp.eq.s32.totalorder %s15, 0
      %p117 = por %p115, %p116
      %p118 = scmp.ne.s32.totalorder %s110, %s112
      %p119 = scmp.eq.s32.totalorder %s20, 1
      %p120 = por %p118, %p119
      %p121 = scmp.ne.s32.totalorder %s112, %s113
      %p122 = scmp.eq.s32.totalorder %s20, 0
      %p123 = por %p121, %p122
      %p124 = scmp.ne.s32.totalorder %s112, %s113
      %p125 = scmp.eq.s32.totalorder %s21, 1
      %p126 = por %p124, %p125
      %p128 = scmp.ne.s32.totalorder %s113, %s127
      %p129 = scmp.eq.s32.totalorder %s21, 0
      %p130 = por %p128, %p129
      %s132 = sadd.s32 %s131, 1
      %p135 = scmp.eq.s32.totalorder %s15, 1
      %p136 = scmp.ne.s32.totalorder %s131, %s133
      %p137 = scmp.eq.s32.totalorder %s15, 0
      %p138 = por %p136, %p137
      %p139 = scmp.ne.s32.totalorder %s131, %s133
      %p140 = scmp.eq.s32.totalorder %s20, 1
      %p141 = por %p139, %p140
      %p142 = scmp.ne.s32.totalorder %s133, %s134
      %p143 = scmp.eq.s32.totalorder %s20, 0
      %p144 = por %p142, %p143
      %p145 = scmp.ne.s32.totalorder %s133, %s134
      %p146 = scmp.eq.s32.totalorder %s21, 1
      %p147 = por %p145, %p146
      %p149 = scmp.ne.s32.totalorder %s134, %s148
      %p150 = scmp.eq.s32.totalorder %s21, 0
      %p151 = por %p149, %p150
      %s153 = sadd.s32 %s152, 1
      %p156 = scmp.eq.s32.totalorder %s15, 1
      %p157 = scmp.ne.s32.totalorder %s152, %s154
      %p158 = scmp.eq.s32.totalorder %s15, 0
      %p159 = por %p157, %p158
      %p160 = scmp.ne.s32.totalorder %s152, %s154
      %p161 = scmp.eq.s32.totalorder %s20, 1
      %p162 = por %p160, %p161
      %p163 = scmp.ne.s32.totalorder %s154, %s155
      %p164 = scmp.eq.s32.totalorder %s20, 0
      %p165 = por %p163, %p164
      %p166 = scmp.ne.s32.totalorder %s154, %s155
      %p167 = scmp.eq.s32.totalorder %s21, 1
      %p168 = por %p166, %p167
      %p170 = scmp.ne.s32.totalorder %s155, %s169
      %p171 = scmp.eq.s32.totalorder %s21, 0
      %p172 = por %p170, %p171
      %s173 = ssub.s32 %s22, %s34
      %p174 = scmp.eq.s32.totalorder %s173, 0
      %s176 = sadd.s32 %s175, 1
      %s177 = scalar_select %p174, %s175, %s176
      %p180 = pneg %p174
      %p181 = scmp.eq.s32.totalorder %s15, 1
      %p182 = por %p180, %p181
      %p183 = scmp.ne.s32.totalorder %s175, %s178
      %p184 = scmp.eq.s32.totalorder %s15, 0
      %p185 = por %p183, %p184
      %p186 = scmp.ne.s32.totalorder %s175, %s178
      %p187 = scmp.eq.s32.totalorder %s20, 1
      %p188 = por %p186, %p187
      %p189 = scmp.ne.s32.totalorder %s178, %s179
      %p190 = scmp.eq.s32.totalorder %s20, 0
      %p191 = por %p189, %p190
      %p192 = scmp.ne.s32.totalorder %s178, %s179
      %p193 = scmp.eq.s32.totalorder %s21, 1
      %p194 = por %p192, %p193
      %p196 = scmp.ne.s32.totalorder %s179, %s195
      %p197 = scmp.eq.s32.totalorder %s21, 0
      %p198 = por %p196, %p197
      %p199 = scmp.le.s32.totalorder 1, %s15
      %p200 = scmp.lt.s32.totalorder %s15, 3
      %p201 = pnand %p199, %p200
      %p202 = pneg %p201
      // Predicated region
      $region9: #{tpu_custom_call.1} parent=5 // pred_check
        _
      $region10: #{tpu_custom_call.1} parent=5 // pred_check_branch
        %204 = sbr.rel (%p201) target = $region12
      $region11: #{tpu_custom_call.1} parent=5 // pred_region
        %s205 = ssub.s32 %s15, 1
        // Predicated region
        $region13: #{tpu_custom_call.1} parent=11 // pred_check
          %p206 = pneg %p102
        $region14: #{tpu_custom_call.1} parent=11 // pred_check_branch
          %208 = sbr.rel (%p206) target = $region16
        $region15: #{tpu_custom_call.1} parent=11 // pred_region
          _
        $region16: #{tpu_custom_call.1} parent=11 // pred_fallthru
          _
        // Predicated region
        $region17: #{tpu_custom_call.1} parent=11 // pred_check
          %p209 = pneg %p123
        $region18: #{tpu_custom_call.1} parent=11 // pred_check_branch
          %211 = sbr.rel (%p209) target = $region20
        $region19: #{tpu_custom_call.1} parent=11 // pred_region
          _
        $region20: #{tpu_custom_call.1} parent=11 // pred_fallthru
          _
        // Predicated region
        $region21: #{tpu_custom_call.1} parent=11 // pred_check
          %p212 = pneg %p144
        $region22: #{tpu_custom_call.1} parent=11 // pred_check_branch
          %214 = sbr.rel (%p212) target = $region24
        $region23: #{tpu_custom_call.1} parent=11 // pred_region
          _
        $region24: #{tpu_custom_call.1} parent=11 // pred_fallthru
          _
        // Predicated region
        $region25: #{tpu_custom_call.1} parent=11 // pred_check
          %p215 = pneg %p165
        $region26: #{tpu_custom_call.1} parent=11 // pred_check_branch
          %217 = sbr.rel (%p215) target = $region28
        $region27: #{tpu_custom_call.1} parent=11 // pred_region
          _
        $region28: #{tpu_custom_call.1} parent=11 // pred_fallthru
          _
      $region12: #{tpu_custom_call.1} parent=5 // pred_fallthru
        _
      %p218 = scmp.lt.s32.totalorder %s15, 2
      // Predicated region
      $region29: #{tpu_custom_call.1} parent=5 // pred_check
        %p219 = pneg %p218
      $region30: #{tpu_custom_call.1} parent=5 // pred_check_branch
        %221 = sbr.rel (%p219) target = $region32
      $region31: #{tpu_custom_call.1} parent=5 // pred_region
        // Predicated region
        $region33: #{tpu_custom_call.1} parent=31 // pred_check
          %p222 = pneg %p49
        $region34: #{tpu_custom_call.1} parent=31 // pred_check_branch
          %224 = sbr.rel (%p222) target = $region36
        $region35: #{tpu_custom_call.1} parent=31 // pred_region
          %s225 = smul.u32 2, %s23
          %p226 = scmp.lt.s32.totalorder %s22, 1
          %s227 = scalar_select %p226, %s22, 1
          %p228 = scmp.lt.s32.totalorder %s225, 1
          %s229 = scalar_select %p228, %s225, 1
          %s230 = smul.addr %s227, 4
          %s231 = sadd.s32 %s229, %s230
          %s232 = smul.addr %s231, 4
          %s233 = scalar_lea.vmem %s0, %s232
          %s234 = smul.u32 2, %s23
        $region36: #{tpu_custom_call.1} parent=31 // pred_fallthru
          _
        // Predicated region
        $region37: #{tpu_custom_call.1} parent=31 // pred_check
          %p235 = pneg %p75
        $region38: #{tpu_custom_call.1} parent=31 // pred_check_branch
          %237 = sbr.rel (%p235) target = $region40
        $region39: #{tpu_custom_call.1} parent=31 // pred_region
          %p238 = scmp.lt.s32.totalorder %s22, 1
          %s239 = scalar_select %p238, %s22, 1
          %s240 = smul.addr %s239, 2
          %s241 = smul.addr %s240, 4
          %s242 = scalar_lea.vmem %s1, %s241
        $region40: #{tpu_custom_call.1} parent=31 // pred_fallthru
          _
      $region32: #{tpu_custom_call.1} parent=5 // pred_fallthru
        _
      %p243 = scmp.le.s32.totalorder 1, %s15
      %p244 = scmp.lt.s32.totalorder %s15, 3
      %p245 = pnand %p243, %p244
      %p246 = pneg %p245
      // Predicated region
      $region41: #{tpu_custom_call.1} parent=5 // pred_check
        _
      $region42: #{tpu_custom_call.1} parent=5 // pred_check_branch
        %248 = sbr.rel (%p245) target = $region44
      $region43: #{tpu_custom_call.1} parent=5 // pred_region
        %s249 = ssub.s32 %s15, 1
        %s250 = smul.u32 2, %s25
        %p251 = scmp.lt.s32.totalorder %s24, 1
        %s252 = scalar_select %p251, %s24, 1
        %p253 = scmp.lt.s32.totalorder %s250, 1
        %s254 = scalar_select %p253, %s250, 1
        %s255 = smul.addr %s252, 4
        %s256 = sadd.s32 %s254, %s255
        %s257 = smul.addr %s256, 4
        %s258 = scalar_lea.vmem %s0, %s257
        %p259 = pneg %p55
        %p260 = pneg %p52
        %p261 = scmp.lt.s32.totalorder %s24, 1
        %s262 = scalar_select %p261, %s24, 1
        %s263 = smul.addr %s262, 2
        %s264 = smul.addr %s263, 4
        %s265 = scalar_lea.vmem %s1, %s264
        %p266 = pneg %p81
        %p267 = pneg %p78
        %p268 = pneg %p102
        %p269 = pneg %p99
        %p270 = pneg %p123
        %p271 = pneg %p120
        %p272 = pneg %p144
        %p273 = pneg %p141
        %p274 = pneg %p165
        %p275 = pneg %p162
        %p276 = pneg %p191
        %p277 = pneg %p188
        %s278 = sand.u32 %s178, 1
        %s279 = scalar_lea.sflag [#allocation3], %s278
        %s280 = sand.u32 %s178, 1
        %s281 = smul.addr %s280, 32
        %s282 = scalar_lea.vmem [#allocation2], %s281
        %s283 = smul.u32 2, %s25
        %p284 = scmp.lt.s32.totalorder %s24, 1
        %s285 = scalar_select %p284, %s24, 1
        %p286 = scmp.lt.s32.totalorder %s283, 1
        %s287 = scalar_select %p286, %s283, 1
        %s288 = smul.addr %s285, 4
        %s289 = sadd.s32 %s287, %s288
        %s290 = smul.addr %s289, 4
        %s291 = scalar_lea.vmem %s0, %s290
        %s292 = smul.u32 2, %s25
        %p293 = scmp.lt.s32.totalorder %s24, 1
        %s294 = scalar_select %p293, %s24, 1
        %s295 = smul.addr %s294, 2
        %s296 = smul.addr %s295, 4
        %s297 = scalar_lea.vmem %s1, %s296
        %p299 = scmp.eq.s32.totalorder %s25, 0
        // Predicated region
        $region45: #{tpu_custom_call.1} parent=43 // pred_check
          %p300 = pneg %p299
        $region46: #{tpu_custom_call.1} parent=43 // pred_check_branch
          %302 = sbr.rel (%p300) target = $region48
        $region47: #{tpu_custom_call.1} parent=43 // pred_region
          %303 = vst [vmem:[%s282] sm:$0xff] 0.0
          %304 = vst [vmem:[%s282 + $0x8] sm:$0xff] 0.0
          %305 = vst [vmem:[%s282 + $0x10] sm:$0xff] 0.0
          %306 = vst [vmem:[%s282 + $0x18] sm:$0xff] 0.0
        $region48: #{tpu_custom_call.1} parent=43 // pred_fallthru
          _
        %v307 = vld [vmem:[%s2] sm:$0xf]
        %v308 = vld [vmem:[%s2 + $0x4] sm:$0xf]
        %v309 = vld [vmem:[%s2 + $0x8] sm:$0xf]
        %v310 = vld [vmem:[%s291] sm:$0xff]
        %v311 = vld [vmem:[%s291 + $0x8] sm:$0xff]
        %v312 = vld [vmem:[%s3] sm:$0xff]
        %v313 = vld [vmem:[%s3 + $0x8] sm:$0xff]
        %v314 = vld [vmem:[%s3 + $0x10] sm:$0xff]
        %316 = vset.pattern.permute.xlu0 0
        %317 = vperm.xlu0 %316, %v312
        %v318 = vpop.permute.xlu0 %317
        %321 = vset.pattern.permute.xlu0 0
        %322 = vperm.xlu0 %321, %v313
        %v323 = vpop.permute.xlu0 %322
        %326 = vset.pattern.permute.xlu0 0
        %327 = vperm.xlu0 %326, %v314
        %v328 = vpop.permute.xlu0 %327
        %v333 = vunpack.c.l.b16 %v307
        %v334 = vunpack.c.l.b16 %v308
        %v335 = vunpack.c.l.b16 %v309
        %v336 = vpack.c.b16 %v334, %v333
        %v337 = vpack.c.b16 %v335, %v335
        %v340 = vunpack.c.l.b16 %v310
        %v341 = vunpack.c.h.b16 %v310
        %v342 = vunpack.c.l.b16 %v311
        %v343 = vunpack.c.h.b16 %v311
        %v344 = vpack.c.b16 %v342, %v340
        %v345 = vpack.c.b16 %v343, %v341
        %vm348 = vcmask 130048
        %v350 = vsel %vm348, %v336, 0
        %v353 = vsel %vm348, %v337, 0
        %355 = vmatprep.subr.bf16.mxu0 0
        %356 = vmatpush1.bf16.msra.mxu0 0
        %357 = vmatprep.subr.bf16.mxu0 0
        %358 = vmatpush1.bf16.msra.mxu0 0
        %359 = vmatprep.subr.bf16.mxu0 0
        %360 = vmatpush1.bf16.msra.mxu0 0
        %361 = vmatprep.subr.bf16.mxu0 0
        %362 = vmatpush1.bf16.msra.mxu0 0
        %363 = vmatprep.subr.bf16.mxu0 0
        %364 = vmatpush1.bf16.msra.mxu0 0
        %365 = vmatprep.subr.bf16.mxu0 0
        %366 = vmatpush1.bf16.msra.mxu0 0
        %367 = vmatprep.subr.bf16.mxu0 0
        %368 = vmatpush1.bf16.msra.mxu0 0
        %369 = vmatprep.subr.bf16.mxu0 %v345
        %370 = vmatpush1.bf16.msra.mxu0 %v344
        %371 = vmatprep.subr.bf16.mxu0 0
        %372 = vmatpush2.bf16.msra.mxu0 0
        %373 = vmatprep.subr.bf16.mxu0 0
        %374 = vmatpush2.bf16.msra.mxu0 0
        %375 = vmatprep.subr.bf16.mxu0 0
        %376 = vmatpush2.bf16.msra.mxu0 0
        %377 = vmatprep.subr.bf16.mxu0 0
        %378 = vmatpush2.bf16.msra.mxu0 0
        %379 = vmatprep.subr.bf16.mxu0 0
        %380 = vmatpush2.bf16.msra.mxu0 0
        %381 = vmatprep.subr.bf16.mxu0 0
        %382 = vmatpush2.bf16.msra.mxu0 0
        %383 = vmatprep.subr.bf16.mxu0 0
        %384 = vmatpush2.bf16.msra.mxu0 0
        %385 = vmatprep.subr.bf16.mxu0 0
        %386 = vmatpush2.bf16.msra.mxu0 0
        %387 = vmatprep.mubr.bf16.mxu0 0
        %388 = vmatmul.mubr.bf16.gmra.mxu0 %v350
        %v389 = vpop.f32.mrf.mxu0
        %v390 = vadd.f32 %v318, %v389
        %v391 = vpop.f32.mrf.mxu0
        %v392 = vadd.f32 %v318, %v391
        %v393 = vpop.f32.mrf.mxu0
        %v394 = vadd.f32 %v323, %v393
        %v395 = vpop.f32.mrf.mxu0
        %v396 = vadd.f32 %v323, %v395
        %397 = vmatprep.mubr.bf16.mxu0 0
        %398 = vmatmul.mubr.bf16.gmra.mxu0 %v353
        %v399 = vpop.f32.mrf.mxu0
        %v400 = vadd.f32 %v328, %v399
        %v401 = vpop.f32.mrf.mxu0
        %v402 = vadd.f32 %v328, %v401
        %v403 = vpop.f32.mrf.mxu0
        %v404 = vpop.f32.mrf.mxu0
        %405 = vdwg.mxu0
        %v406 = vpack.c.bf16 %v390, %v390
        %v407 = vpack.c.bf16 %v392, %v392
        %v408 = vld [vmem:[%s297] sm:$0xff]
        %409 = vxpose.xlu0.c.b16.start [1/8] %v406, 128
        %410 = vxpose.xlu0.c.b16.cont [2/8] 0, 128
        %411 = vxpose.xlu0.c.b16.cont [3/8] 0, 128
        %412 = vxpose.xlu0.c.b16.cont [4/8] 0, 128
        %413 = vxpose.xlu0.c.b16.cont [5/8] 0, 128
        %414 = vxpose.xlu0.c.b16.cont [6/8] 0, 128
        %415 = vxpose.xlu0.c.b16.cont [7/8] 0, 128
        %416 = vxpose.xlu0.c.b16.end [8/8] 0, 128
        %v417 = vpop.trf.xlu0
        %v418 = vpop.trf.xlu0
        %v419 = vpop.trf.xlu0
        %v420 = vpop.trf.xlu0
        %v421 = vpop.trf.xlu0
        %v422 = vpop.trf.xlu0
        %v423 = vpop.trf.xlu0
        %v424 = vpop.trf.xlu0
        %425 = vxpose.xlu0.c.b16.start [1/8] %v407, 128
        %426 = vxpose.xlu0.c.b16.cont [2/8] 0, 128
        %427 = vxpose.xlu0.c.b16.cont [3/8] 0, 128
        %428 = vxpose.xlu0.c.b16.cont [4/8] 0, 128
        %429 = vxpose.xlu0.c.b16.cont [5/8] 0, 128
        %430 = vxpose.xlu0.c.b16.cont [6/8] 0, 128
        %431 = vxpose.xlu0.c.b16.cont [7/8] 0, 128
        %432 = vxpose.xlu0.c.b16.end [8/8] 0, 128
        %v433 = vpop.trf.xlu0
        %v434 = vpop.trf.xlu0
        %v435 = vpop.trf.xlu0
        %v436 = vpop.trf.xlu0
        %v437 = vpop.trf.xlu0
        %v438 = vpop.trf.xlu0
        %v439 = vpop.trf.xlu0
        %v440 = vpop.trf.xlu0
        %v442 = vunpack.c.l.b16 %v408
        %v443 = vunpack.c.h.b16 %v408
        %v444 = vpack.c.b16 %v442, %v442
        %v445 = vpack.c.b16 %v443, %v443
        %vm446 = vcmask 64512
        %v448 = vsel %vm446, %v417, 0
        %v451 = vsel %vm446, %v418, 0
        %v454 = vsel %vm446, %v419, 0
        %v457 = vsel %vm446, %v420, 0
        %v460 = vsel %vm446, %v421, 0
        %v463 = vsel %vm446, %v422, 0
        %v466 = vsel %vm446, %v423, 0
        %v469 = vsel %vm446, %v424, 0
        %v472 = vsel %vm446, %v433, 0
        %v475 = vsel %vm446, %v434, 0
        %v478 = vsel %vm446, %v435, 0
        %v481 = vsel %vm446, %v436, 0
        %v484 = vsel %vm446, %v437, 0
        %v487 = vsel %vm446, %v438, 0
        %v490 = vsel %vm446, %v439, 0
        %v493 = vsel %vm446, %v440, 0
        %vm495 = vcmask 1043456
        %v497 = vsel %vm495, %v444, 0
        %v500 = vsel %vm495, %v445, 0
        %502 = vmatprep.subr.bf16.mxu0 0
        %503 = vmatpush1.bf16.msra.mxu0 0
        %504 = vmatprep.subr.bf16.mxu0 0
        %505 = vmatpush1.bf16.msra.mxu0 0
        %506 = vmatprep.subr.bf16.mxu0 0
        %507 = vmatpush1.bf16.msra.mxu0 0
        %508 = vmatprep.subr.bf16.mxu0 0
        %509 = vmatpush1.bf16.msra.mxu0 0
        %510 = vmatprep.subr.bf16.mxu0 0
        %511 = vmatpush1.bf16.msra.mxu0 0
        %512 = vmatprep.subr.bf16.mxu0 0
        %513 = vmatpush1.bf16.msra.mxu0 0
        %514 = vmatprep.subr.bf16.mxu0 0
        %515 = vmatpush1.bf16.msra.mxu0 0
        %516 = vmatprep.subr.bf16.mxu0 %v500
        %517 = vmatpush1.bf16.msra.mxu0 %v497
        %518 = vmatprep.subr.bf16.mxu0 0
        %519 = vmatpush2.bf16.msra.mxu0 0
        %520 = vmatprep.subr.bf16.mxu0 0
        %521 = vmatpush2.bf16.msra.mxu0 0
        %522 = vmatprep.subr.bf16.mxu0 0
        %523 = vmatpush2.bf16.msra.mxu0 0
        %524 = vmatprep.subr.bf16.mxu0 0
        %525 = vmatpush2.bf16.msra.mxu0 0
        %526 = vmatprep.subr.bf16.mxu0 0
        %527 = vmatpush2.bf16.msra.mxu0 0
        %528 = vmatprep.subr.bf16.mxu0 0
        %529 = vmatpush2.bf16.msra.mxu0 0
        %530 = vmatprep.subr.bf16.mxu0 0
        %531 = vmatpush2.bf16.msra.mxu0 0
        %532 = vmatprep.subr.bf16.mxu0 0
        %533 = vmatpush2.bf16.msra.mxu0 0
        %534 = vmatprep.mubr.bf16.mxu0 0
        %535 = vmatmul.mubr.bf16.gmra.mxu0 %v448
        %v536 = vpop.f32.mrf.mxu0
        %v537 = vadd.f32 0.0, %v536
        %v538 = vpop.f32.mrf.mxu0
        %v539 = vadd.f32 0.0, %v538
        %v540 = vpop.f32.mrf.mxu0
        %v541 = vadd.f32 0.0, %v540
        %v542 = vpop.f32.mrf.mxu0
        %v543 = vadd.f32 0.0, %v542
        %544 = vmatprep.mubr.bf16.mxu0 0
        %545 = vmatmul.mubr.bf16.gmra.mxu0 %v451
        %v546 = vpop.f32.mrf.mxu0
        %v547 = vadd.f32 0.0, %v546
        %v548 = vpop.f32.mrf.mxu0
        %v549 = vadd.f32 0.0, %v548
        %v550 = vpop.f32.mrf.mxu0
        %v551 = vadd.f32 0.0, %v550
        %v552 = vpop.f32.mrf.mxu0
        %v553 = vadd.f32 0.0, %v552
        %554 = vmatprep.mubr.bf16.mxu0 0
        %555 = vmatmul.mubr.bf16.gmra.mxu0 %v454
        %v556 = vpop.f32.mrf.mxu0
        %v557 = vadd.f32 0.0, %v556
        %v558 = vpop.f32.mrf.mxu0
        %v559 = vadd.f32 0.0, %v558
        %v560 = vpop.f32.mrf.mxu0
        %v561 = vadd.f32 0.0, %v560
        %v562 = vpop.f32.mrf.mxu0
        %v563 = vadd.f32 0.0, %v562
        %564 = vmatprep.mubr.bf16.mxu0 0
        %565 = vmatmul.mubr.bf16.gmra.mxu0 %v457
        %v566 = vpop.f32.mrf.mxu0
        %v567 = vadd.f32 0.0, %v566
        %v568 = vpop.f32.mrf.mxu0
        %v569 = vadd.f32 0.0, %v568
        %v570 = vpop.f32.mrf.mxu0
        %v571 = vadd.f32 0.0, %v570
        %v572 = vpop.f32.mrf.mxu0
        %v573 = vadd.f32 0.0, %v572
        %574 = vmatprep.mubr.bf16.mxu0 0
        %575 = vmatmul.mubr.bf16.gmra.mxu0 %v460
        %v576 = vpop.f32.mrf.mxu0
        %v577 = vadd.f32 0.0, %v576
        %v578 = vpop.f32.mrf.mxu0
        %v579 = vadd.f32 0.0, %v578
        %v580 = vpop.f32.mrf.mxu0
        %v581 = vadd.f32 0.0, %v580
        %v582 = vpop.f32.mrf.mxu0
        %v583 = vadd.f32 0.0, %v582
        %584 = vmatprep.mubr.bf16.mxu0 0
        %585 = vmatmul.mubr.bf16.gmra.mxu0 %v463
        %v586 = vpop.f32.mrf.mxu0
        %v587 = vadd.f32 0.0, %v586
        %v588 = vpop.f32.mrf.mxu0
        %v589 = vadd.f32 0.0, %v588
        %v590 = vpop.f32.mrf.mxu0
        %v591 = vadd.f32 0.0, %v590
        %v592 = vpop.f32.mrf.mxu0
        %v593 = vadd.f32 0.0, %v592
        %594 = vmatprep.mubr.bf16.mxu0 0
        %595 = vmatmul.mubr.bf16.gmra.mxu0 %v466
        %v596 = vpop.f32.mrf.mxu0
        %v597 = vadd.f32 0.0, %v596
        %v598 = vpop.f32.mrf.mxu0
        %v599 = vadd.f32 0.0, %v598
        %v600 = vpop.f32.mrf.mxu0
        %v601 = vadd.f32 0.0, %v600
        %v602 = vpop.f32.mrf.mxu0
        %v603 = vadd.f32 0.0, %v602
        %604 = vmatprep.mubr.bf16.mxu0 0
        %605 = vmatmul.mubr.bf16.gmra.mxu0 %v469
        %v606 = vpop.f32.mrf.mxu0
        %v607 = vadd.f32 0.0, %v606
        %v608 = vpop.f32.mrf.mxu0
        %v609 = vadd.f32 0.0, %v608
        %v610 = vpop.f32.mrf.mxu0
        %v611 = vadd.f32 0.0, %v610
        %v612 = vpop.f32.mrf.mxu0
        %v613 = vadd.f32 0.0, %v612
        %614 = vmatprep.mubr.bf16.mxu0 0
        %615 = vmatmul.mubr.bf16.gmra.mxu0 %v472
        %v616 = vpop.f32.mrf.mxu0
        %v617 = vadd.f32 0.0, %v616
        %v618 = vpop.f32.mrf.mxu0
        %v619 = vadd.f32 0.0, %v618
        %v620 = vpop.f32.mrf.mxu0
        %v621 = vadd.f32 0.0, %v620
        %v622 = vpop.f32.mrf.mxu0
        %v623 = vadd.f32 0.0, %v622
        %624 = vmatprep.mubr.bf16.mxu0 0
        %625 = vmatmul.mubr.bf16.gmra.mxu0 %v475
        %v626 = vpop.f32.mrf.mxu0
        %v627 = vadd.f32 0.0, %v626
        %v628 = vpop.f32.mrf.mxu0
        %v629 = vadd.f32 0.0, %v628
        %v630 = vpop.f32.mrf.mxu0
        %v631 = vadd.f32 0.0, %v630
        %v632 = vpop.f32.mrf.mxu0
        %v633 = vadd.f32 0.0, %v632
        %634 = vmatprep.mubr.bf16.mxu0 0
        %635 = vmatmul.mubr.bf16.gmra.mxu0 %v478
        %v636 = vpop.f32.mrf.mxu0
        %v637 = vadd.f32 0.0, %v636
        %v638 = vpop.f32.mrf.mxu0
        %v639 = vadd.f32 0.0, %v638
        %v640 = vpop.f32.mrf.mxu0
        %v641 = vadd.f32 0.0, %v640
        %v642 = vpop.f32.mrf.mxu0
        %v643 = vadd.f32 0.0, %v642
        %644 = vmatprep.mubr.bf16.mxu0 0
        %645 = vmatmul.mubr.bf16.gmra.mxu0 %v481
        %v646 = vpop.f32.mrf.mxu0
        %v647 = vadd.f32 0.0, %v646
        %v648 = vpop.f32.mrf.mxu0
        %v649 = vadd.f32 0.0, %v648
        %v650 = vpop.f32.mrf.mxu0
        %v651 = vadd.f32 0.0, %v650
        %v652 = vpop.f32.mrf.mxu0
        %v653 = vadd.f32 0.0, %v652
        %654 = vmatprep.mubr.bf16.mxu0 0
        %655 = vmatmul.mubr.bf16.gmra.mxu0 %v484
        %v656 = vpop.f32.mrf.mxu0
        %v657 = vadd.f32 0.0, %v656
        %v658 = vpop.f32.mrf.mxu0
        %v659 = vadd.f32 0.0, %v658
        %v660 = vpop.f32.mrf.mxu0
        %v661 = vadd.f32 0.0, %v660
        %v662 = vpop.f32.mrf.mxu0
        %v663 = vadd.f32 0.0, %v662
        %664 = vmatprep.mubr.bf16.mxu0 0
        %665 = vmatmul.mubr.bf16.gmra.mxu0 %v487
        %v666 = vpop.f32.mrf.mxu0
        %v667 = vadd.f32 0.0, %v666
        %v668 = vpop.f32.mrf.mxu0
        %v669 = vadd.f32 0.0, %v668
        %v670 = vpop.f32.mrf.mxu0
        %v671 = vadd.f32 0.0, %v670
        %v672 = vpop.f32.mrf.mxu0
        %v673 = vadd.f32 0.0, %v672
        %674 = vmatprep.mubr.bf16.mxu0 0
        %675 = vmatmul.mubr.bf16.gmra.mxu0 %v490
        %v676 = vpop.f32.mrf.mxu0
        %v677 = vadd.f32 0.0, %v676
        %v678 = vpop.f32.mrf.mxu0
        %v679 = vadd.f32 0.0, %v678
        %v680 = vpop.f32.mrf.mxu0
        %v681 = vadd.f32 0.0, %v680
        %v682 = vpop.f32.mrf.mxu0
        %v683 = vadd.f32 0.0, %v682
        %684 = vmatprep.mubr.bf16.mxu0 0
        %685 = vmatmul.mubr.bf16.gmra.mxu0 %v493
        %v686 = vpop.f32.mrf.mxu0
        %v687 = vadd.f32 0.0, %v686
        %v688 = vpop.f32.mrf.mxu0
        %v689 = vadd.f32 0.0, %v688
        %v690 = vpop.f32.mrf.mxu0
        %v691 = vadd.f32 0.0, %v690
        %v692 = vpop.f32.mrf.mxu0
        %v693 = vadd.f32 0.0, %v692
        %694 = vdwg.mxu0
        %v695 = vmax.f32 %v537, %v539
        %696 = vmax.xlane.f32.xlu0 %v695
        %v697 = vpop.xlane.xlu0 %696
        %v698 = vmax.f32 %v541, %v543
        %699 = vmax.xlane.f32.xlu0 %v698
        %v700 = vpop.xlane.xlu0 %699
        %v701 = vmax.f32 %v547, %v549
        %702 = vmax.xlane.f32.xlu0 %v701
        %v703 = vpop.xlane.xlu0 %702
        %v704 = vmax.f32 %v551, %v553
        %705 = vmax.xlane.f32.xlu0 %v704
        %v706 = vpop.xlane.xlu0 %705
        %v707 = vmax.f32 %v557, %v559
        %708 = vmax.xlane.f32.xlu0 %v707
        %v709 = vpop.xlane.xlu0 %708
        %v710 = vmax.f32 %v561, %v563
        %711 = vmax.xlane.f32.xlu0 %v710
        %v712 = vpop.xlane.xlu0 %711
        %v713 = vmax.f32 %v567, %v569
        %714 = vmax.xlane.f32.xlu0 %v713
        %v715 = vpop.xlane.xlu0 %714
        %v716 = vmax.f32 %v571, %v573
        %717 = vmax.xlane.f32.xlu0 %v716
        %v718 = vpop.xlane.xlu0 %717
        %v719 = vmax.f32 %v577, %v579
        %720 = vmax.xlane.f32.xlu0 %v719
        %v721 = vpop.xlane.xlu0 %720
        %v722 = vmax.f32 %v581, %v583
        %723 = vmax.xlane.f32.xlu0 %v722
        %v724 = vpop.xlane.xlu0 %723
        %v725 = vmax.f32 %v587, %v589
        %726 = vmax.xlane.f32.xlu0 %v725
        %v727 = vpop.xlane.xlu0 %726
        %v728 = vmax.f32 %v591, %v593
        %729 = vmax.xlane.f32.xlu0 %v728
        %v730 = vpop.xlane.xlu0 %729
        %v731 = vmax.f32 %v597, %v599
        %732 = vmax.xlane.f32.xlu0 %v731
        %v733 = vpop.xlane.xlu0 %732
        %v734 = vmax.f32 %v601, %v603
        %735 = vmax.xlane.f32.xlu0 %v734
        %v736 = vpop.xlane.xlu0 %735
        %v737 = vmax.f32 %v607, %v609
        %738 = vmax.xlane.f32.xlu0 %v737
        %v739 = vpop.xlane.xlu0 %738
        %v740 = vmax.f32 %v611, %v613
        %741 = vmax.xlane.f32.xlu0 %v740
        %v742 = vpop.xlane.xlu0 %741
        %v743 = vmax.f32 %v617, %v619
        %744 = vmax.xlane.f32.xlu0 %v743
        %v745 = vpop.xlane.xlu0 %744
        %v746 = vmax.f32 %v621, %v623
        %747 = vmax.xlane.f32.xlu0 %v746
        %v748 = vpop.xlane.xlu0 %747
        %v749 = vmax.f32 %v627, %v629
        %750 = vmax.xlane.f32.xlu0 %v749
        %v751 = vpop.xlane.xlu0 %750
        %v752 = vmax.f32 %v631, %v633
        %753 = vmax.xlane.f32.xlu0 %v752
        %v754 = vpop.xlane.xlu0 %753
        %v755 = vmax.f32 %v637, %v639
        %756 = vmax.xlane.f32.xlu0 %v755
        %v757 = vpop.xlane.xlu0 %756
        %v758 = vmax.f32 %v641, %v643
        %759 = vmax.xlane.f32.xlu0 %v758
        %v760 = vpop.xlane.xlu0 %759
        %v761 = vmax.f32 %v647, %v649
        %762 = vmax.xlane.f32.xlu0 %v761
        %v763 = vpop.xlane.xlu0 %762
        %v764 = vmax.f32 %v651, %v653
        %765 = vmax.xlane.f32.xlu0 %v764
        %v766 = vpop.xlane.xlu0 %765
        %v767 = vmax.f32 %v657, %v659
        %768 = vmax.xlane.f32.xlu0 %v767
        %v769 = vpop.xlane.xlu0 %768
        %v770 = vmax.f32 %v661, %v663
        %771 = vmax.xlane.f32.xlu0 %v770
        %v772 = vpop.xlane.xlu0 %771
        %v773 = vmax.f32 %v667, %v669
        %774 = vmax.xlane.f32.xlu0 %v773
        %v775 = vpop.xlane.xlu0 %774
        %v776 = vmax.f32 %v671, %v673
        %777 = vmax.xlane.f32.xlu0 %v776
        %v778 = vpop.xlane.xlu0 %777
        %v779 = vmax.f32 %v677, %v679
        %780 = vmax.xlane.f32.xlu0 %v779
        %v781 = vpop.xlane.xlu0 %780
        %v782 = vmax.f32 %v681, %v683
        %783 = vmax.xlane.f32.xlu0 %v782
        %v784 = vpop.xlane.xlu0 %783
        %v785 = vmax.f32 %v687, %v689
        %786 = vmax.xlane.f32.xlu0 %v785
        %v787 = vpop.xlane.xlu0 %786
        %v788 = vmax.f32 %v691, %v693
        %789 = vmax.xlane.f32.xlu0 %v788
        %v790 = vpop.xlane.xlu0 %789
        %v791 = vsub.f32 %v537, %v697
        %v792 = vsub.f32 %v539, %v697
        %v793 = vsub.f32 %v541, %v700
        %v794 = vsub.f32 %v543, %v700
        %v795 = vsub.f32 %v547, %v703
        %v796 = vsub.f32 %v549, %v703
        %v797 = vsub.f32 %v551, %v706
        %v798 = vsub.f32 %v553, %v706
        %v799 = vsub.f32 %v557, %v709
        %v800 = vsub.f32 %v559, %v709
        %v801 = vsub.f32 %v561, %v712
        %v802 = vsub.f32 %v563, %v712
        %v803 = vsub.f32 %v567, %v715
        %v804 = vsub.f32 %v569, %v715
        %v805 = vsub.f32 %v571, %v718
        %v806 = vsub.f32 %v573, %v718
        %v807 = vsub.f32 %v577, %v721
        %v808 = vsub.f32 %v579, %v721
        %v809 = vsub.f32 %v581, %v724
        %v810 = vsub.f32 %v583, %v724
        %v811 = vsub.f32 %v587, %v727
        %v812 = vsub.f32 %v589, %v727
        %v813 = vsub.f32 %v591, %v730
        %v814 = vsub.f32 %v593, %v730
        %v815 = vsub.f32 %v597, %v733
        %v816 = vsub.f32 %v599, %v733
        %v817 = vsub.f32 %v601, %v736
        %v818 = vsub.f32 %v603, %v736
        %v819 = vsub.f32 %v607, %v739
        %v820 = vsub.f32 %v609, %v739
        %v821 = vsub.f32 %v611, %v742
        %v822 = vsub.f32 %v613, %v742
        %v823 = vsub.f32 %v617, %v745
        %v824 = vsub.f32 %v619, %v745
        %v825 = vsub.f32 %v621, %v748
        %v826 = vsub.f32 %v623, %v748
        %v827 = vsub.f32 %v627, %v751
        %v828 = vsub.f32 %v629, %v751
        %v829 = vsub.f32 %v631, %v754
        %v830 = vsub.f32 %v633, %v754
        %v831 = vsub.f32 %v637, %v757
        %v832 = vsub.f32 %v639, %v757
        %v833 = vsub.f32 %v641, %v760
        %v834 = vsub.f32 %v643, %v760
        %v835 = vsub.f32 %v647, %v763
        %v836 = vsub.f32 %v649, %v763
        %v837 = vsub.f32 %v651, %v766
        %v838 = vsub.f32 %v653, %v766
        %v839 = vsub.f32 %v657, %v769
        %v840 = vsub.f32 %v659, %v769
        %v841 = vsub.f32 %v661, %v772
        %v842 = vsub.f32 %v663, %v772
        %v843 = vsub.f32 %v667, %v775
        %v844 = vsub.f32 %v669, %v775
        %v845 = vsub.f32 %v671, %v778
        %v846 = vsub.f32 %v673, %v778
        %v847 = vsub.f32 %v677, %v781
        %v848 = vsub.f32 %v679, %v781
        %v849 = vsub.f32 %v681, %v784
        %v850 = vsub.f32 %v683, %v784
        %v851 = vsub.f32 %v687, %v787
        %v852 = vsub.f32 %v689, %v787
        %v853 = vsub.f32 %v691, %v790
        %v854 = vsub.f32 %v693, %v790
        %v855 = vpack.c.bf16 %v793, %v791
        %v856 = vpack.c.bf16 %v794, %v792
        %v857 = vpack.c.bf16 %v797, %v795
        %v858 = vpack.c.bf16 %v798, %v796
        %v859 = vpack.c.bf16 %v801, %v799
        %v860 = vpack.c.bf16 %v802, %v800
        %v861 = vpack.c.bf16 %v805, %v803
        %v862 = vpack.c.bf16 %v806, %v804
        %v863 = vpack.c.bf16 %v809, %v807
        %v864 = vpack.c.bf16 %v810, %v808
        %v865 = vpack.c.bf16 %v813, %v811
        %v866 = vpack.c.bf16 %v814, %v812
        %v867 = vpack.c.bf16 %v817, %v815
        %v868 = vpack.c.bf16 %v818, %v816
        %v869 = vpack.c.bf16 %v821, %v819
        %v870 = vpack.c.bf16 %v822, %v820
        %v871 = vpack.c.bf16 %v825, %v823
        %v872 = vpack.c.bf16 %v826, %v824
        %v873 = vpack.c.bf16 %v829, %v827
        %v874 = vpack.c.bf16 %v830, %v828
        %v875 = vpack.c.bf16 %v833, %v831
        %v876 = vpack.c.bf16 %v834, %v832
        %v877 = vpack.c.bf16 %v837, %v835
        %v878 = vpack.c.bf16 %v838, %v836
        %v879 = vpack.c.bf16 %v841, %v839
        %v880 = vpack.c.bf16 %v842, %v840
        %v881 = vpack.c.bf16 %v845, %v843
        %v882 = vpack.c.bf16 %v846, %v844
        %v883 = vpack.c.bf16 %v849, %v847
        %v884 = vpack.c.bf16 %v850, %v848
        %v885 = vpack.c.bf16 %v853, %v851
        %v886 = vpack.c.bf16 %v854, %v852
        %v888 = vmul.bf16 %v855, 1069105081
        %v889 = vpow.bf16.pop %v888
        %v891 = vmul.bf16 %v856, 1069105081
        %v892 = vpow.bf16.pop %v891
        %v894 = vmul.bf16 %v857, 1069105081
        %v895 = vpow.bf16.pop %v894
        %v897 = vmul.bf16 %v858, 1069105081
        %v898 = vpow.bf16.pop %v897
        %v900 = vmul.bf16 %v859, 1069105081
        %v901 = vpow.bf16.pop %v900
        %v903 = vmul.bf16 %v860, 1069105081
        %v904 = vpow.bf16.pop %v903
        %v906 = vmul.bf16 %v861, 1069105081
        %v907 = vpow.bf16.pop %v906
        %v909 = vmul.bf16 %v862, 1069105081
        %v910 = vpow.bf16.pop %v909
        %v912 = vmul.bf16 %v863, 1069105081
        %v913 = vpow.bf16.pop %v912
        %v915 = vmul.bf16 %v864, 1069105081
        %v916 = vpow.bf16.pop %v915
        %v918 = vmul.bf16 %v865, 1069105081
        %v919 = vpow.bf16.pop %v918
        %v921 = vmul.bf16 %v866, 1069105081
        %v922 = vpow.bf16.pop %v921
        %v924 = vmul.bf16 %v867, 1069105081
        %v925 = vpow.bf16.pop %v924
        %v927 = vmul.bf16 %v868, 1069105081
        %v928 = vpow.bf16.pop %v927
        %v930 = vmul.bf16 %v869, 1069105081
        %v931 = vpow.bf16.pop %v930
        %v933 = vmul.bf16 %v870, 1069105081
        %v934 = vpow.bf16.pop %v933
        %v936 = vmul.bf16 %v871, 1069105081
        %v937 = vpow.bf16.pop %v936
        %v939 = vmul.bf16 %v872, 1069105081
        %v940 = vpow.bf16.pop %v939
        %v942 = vmul.bf16 %v873, 1069105081
        %v943 = vpow.bf16.pop %v942
        %v945 = vmul.bf16 %v874, 1069105081
        %v946 = vpow.bf16.pop %v945
        %v948 = vmul.bf16 %v875, 1069105081
        %v949 = vpow.bf16.pop %v948
        %v951 = vmul.bf16 %v876, 1069105081
        %v952 = vpow.bf16.pop %v951
        %v954 = vmul.bf16 %v877, 1069105081
        %v955 = vpow.bf16.pop %v954
        %v957 = vmul.bf16 %v878, 1069105081
        %v958 = vpow.bf16.pop %v957
        %v960 = vmul.bf16 %v879, 1069105081
        %v961 = vpow.bf16.pop %v960
        %v963 = vmul.bf16 %v880, 1069105081
        %v964 = vpow.bf16.pop %v963
        %v966 = vmul.bf16 %v881, 1069105081
        %v967 = vpow.bf16.pop %v966
        %v969 = vmul.bf16 %v882, 1069105081
        %v970 = vpow.bf16.pop %v969
        %v972 = vmul.bf16 %v883, 1069105081
        %v973 = vpow.bf16.pop %v972
        %v975 = vmul.bf16 %v884, 1069105081
        %v976 = vpow.bf16.pop %v975
        %v978 = vmul.bf16 %v885, 1069105081
        %v979 = vpow.bf16.pop %v978
        %v981 = vmul.bf16 %v886, 1069105081
        %v982 = vpow.bf16.pop %v981
        %v983 = vunpack.c.l.bf16 %v889
        %v984 = vunpack.c.l.bf16 %v892
        %v985 = vunpack.c.h.bf16 %v889
        %v986 = vunpack.c.h.bf16 %v892
        %v987 = vunpack.c.l.bf16 %v895
        %v988 = vunpack.c.l.bf16 %v898
        %v989 = vunpack.c.h.bf16 %v895
        %v990 = vunpack.c.h.bf16 %v898
        %v991 = vunpack.c.l.bf16 %v901
        %v992 = vunpack.c.l.bf16 %v904
        %v993 = vunpack.c.h.bf16 %v901
        %v994 = vunpack.c.h.bf16 %v904
        %v995 = vunpack.c.l.bf16 %v907
        %v996 = vunpack.c.l.bf16 %v910
        %v997 = vunpack.c.h.bf16 %v907
        %v998 = vunpack.c.h.bf16 %v910
        %v999 = vunpack.c.l.bf16 %v913
        %v1000 = vunpack.c.l.bf16 %v916
        %v1001 = vunpack.c.h.bf16 %v913
        %v1002 = vunpack.c.h.bf16 %v916
        %v1003 = vunpack.c.l.bf16 %v919
        %v1004 = vunpack.c.l.bf16 %v922
        %v1005 = vunpack.c.h.bf16 %v919
        %v1006 = vunpack.c.h.bf16 %v922
        %v1007 = vunpack.c.l.bf16 %v925
        %v1008 = vunpack.c.l.bf16 %v928
        %v1009 = vunpack.c.h.bf16 %v925
        %v1010 = vunpack.c.h.bf16 %v928
        %v1011 = vunpack.c.l.bf16 %v931
        %v1012 = vunpack.c.l.bf16 %v934
        %v1013 = vunpack.c.h.bf16 %v931
        %v1014 = vunpack.c.h.bf16 %v934
        %v1015 = vunpack.c.l.bf16 %v937
        %v1016 = vunpack.c.l.bf16 %v940
        %v1017 = vunpack.c.h.bf16 %v937
        %v1018 = vunpack.c.h.bf16 %v940
        %v1019 = vunpack.c.l.bf16 %v943
        %v1020 = vunpack.c.l.bf16 %v946
        %v1021 = vunpack.c.h.bf16 %v943
        %v1022 = vunpack.c.h.bf16 %v946
        %v1023 = vunpack.c.l.bf16 %v949
        %v1024 = vunpack.c.l.bf16 %v952
        %v1025 = vunpack.c.h.bf16 %v949
        %v1026 = vunpack.c.h.bf16 %v952
        %v1027 = vunpack.c.l.bf16 %v955
        %v1028 = vunpack.c.l.bf16 %v958
        %v1029 = vunpack.c.h.bf16 %v955
        %v1030 = vunpack.c.h.bf16 %v958
        %v1031 = vunpack.c.l.bf16 %v961
        %v1032 = vunpack.c.l.bf16 %v964
        %v1033 = vunpack.c.h.bf16 %v961
        %v1034 = vunpack.c.h.bf16 %v964
        %v1035 = vunpack.c.l.bf16 %v967
        %v1036 = vunpack.c.l.bf16 %v970
        %v1037 = vunpack.c.h.bf16 %v967
        %v1038 = vunpack.c.h.bf16 %v970
        %v1039 = vunpack.c.l.bf16 %v973
        %v1040 = vunpack.c.l.bf16 %v976
        %v1041 = vunpack.c.h.bf16 %v973
        %v1042 = vunpack.c.h.bf16 %v976
        %v1043 = vunpack.c.l.bf16 %v979
        %v1044 = vunpack.c.l.bf16 %v982
        %v1045 = vunpack.c.h.bf16 %v979
        %v1046 = vunpack.c.h.bf16 %v982
        %v1047 = vadd.f32 %v983, %v984
        %1048 = vadd.xlane.f32.xlu0 %v1047
        %v1049 = vpop.xlane.xlu0 %1048
        %v1050 = vadd.f32 %v985, %v986
        %1051 = vadd.xlane.f32.xlu0 %v1050
        %v1052 = vpop.xlane.xlu0 %1051
        %v1053 = vadd.f32 %v987, %v988
        %1054 = vadd.xlane.f32.xlu0 %v1053
        %v1055 = vpop.xlane.xlu0 %1054
        %v1056 = vadd.f32 %v989, %v990
        %1057 = vadd.xlane.f32.xlu0 %v1056
        %v1058 = vpop.xlane.xlu0 %1057
        %v1059 = vadd.f32 %v991, %v992
        %1060 = vadd.xlane.f32.xlu0 %v1059
        %v1061 = vpop.xlane.xlu0 %1060
        %v1062 = vadd.f32 %v993, %v994
        %1063 = vadd.xlane.f32.xlu0 %v1062
        %v1064 = vpop.xlane.xlu0 %1063
        %v1065 = vadd.f32 %v995, %v996
        %1066 = vadd.xlane.f32.xlu0 %v1065
        %v1067 = vpop.xlane.xlu0 %1066
        %v1068 = vadd.f32 %v997, %v998
        %1069 = vadd.xlane.f32.xlu0 %v1068
        %v1070 = vpop.xlane.xlu0 %1069
        %v1071 = vadd.f32 %v999, %v1000
        %1072 = vadd.xlane.f32.xlu0 %v1071
        %v1073 = vpop.xlane.xlu0 %1072
        %v1074 = vadd.f32 %v1001, %v1002
        %1075 = vadd.xlane.f32.xlu0 %v1074
        %v1076 = vpop.xlane.xlu0 %1075
        %v1077 = vadd.f32 %v1003, %v1004
        %1078 = vadd.xlane.f32.xlu0 %v1077
        %v1079 = vpop.xlane.xlu0 %1078
        %v1080 = vadd.f32 %v1005, %v1006
        %1081 = vadd.xlane.f32.xlu0 %v1080
        %v1082 = vpop.xlane.xlu0 %1081
        %v1083 = vadd.f32 %v1007, %v1008
        %1084 = vadd.xlane.f32.xlu0 %v1083
        %v1085 = vpop.xlane.xlu0 %1084
        %v1086 = vadd.f32 %v1009, %v1010
        %1087 = vadd.xlane.f32.xlu0 %v1086
        %v1088 = vpop.xlane.xlu0 %1087
        %v1089 = vadd.f32 %v1011, %v1012
        %1090 = vadd.xlane.f32.xlu0 %v1089
        %v1091 = vpop.xlane.xlu0 %1090
        %v1092 = vadd.f32 %v1013, %v1014
        %1093 = vadd.xlane.f32.xlu0 %v1092
        %v1094 = vpop.xlane.xlu0 %1093
        %v1095 = vadd.f32 %v1015, %v1016
        %1096 = vadd.xlane.f32.xlu0 %v1095
        %v1097 = vpop.xlane.xlu0 %1096
        %v1098 = vadd.f32 %v1017, %v1018
        %1099 = vadd.xlane.f32.xlu0 %v1098
        %v1100 = vpop.xlane.xlu0 %1099
        %v1101 = vadd.f32 %v1019, %v1020
        %1102 = vadd.xlane.f32.xlu0 %v1101
        %v1103 = vpop.xlane.xlu0 %1102
        %v1104 = vadd.f32 %v1021, %v1022
        %1105 = vadd.xlane.f32.xlu0 %v1104
        %v1106 = vpop.xlane.xlu0 %1105
        %v1107 = vadd.f32 %v1023, %v1024
        %1108 = vadd.xlane.f32.xlu0 %v1107
        %v1109 = vpop.xlane.xlu0 %1108
        %v1110 = vadd.f32 %v1025, %v1026
        %1111 = vadd.xlane.f32.xlu0 %v1110
        %v1112 = vpop.xlane.xlu0 %1111
        %v1113 = vadd.f32 %v1027, %v1028
        %1114 = vadd.xlane.f32.xlu0 %v1113
        %v1115 = vpop.xlane.xlu0 %1114
        %v1116 = vadd.f32 %v1029, %v1030
        %1117 = vadd.xlane.f32.xlu0 %v1116
        %v1118 = vpop.xlane.xlu0 %1117
        %v1119 = vadd.f32 %v1031, %v1032
        %1120 = vadd.xlane.f32.xlu0 %v1119
        %v1121 = vpop.xlane.xlu0 %1120
        %v1122 = vadd.f32 %v1033, %v1034
        %1123 = vadd.xlane.f32.xlu0 %v1122
        %v1124 = vpop.xlane.xlu0 %1123
        %v1125 = vadd.f32 %v1035, %v1036
        %1126 = vadd.xlane.f32.xlu0 %v1125
        %v1127 = vpop.xlane.xlu0 %1126
        %v1128 = vadd.f32 %v1037, %v1038
        %1129 = vadd.xlane.f32.xlu0 %v1128
        %v1130 = vpop.xlane.xlu0 %1129
        %v1131 = vadd.f32 %v1039, %v1040
        %1132 = vadd.xlane.f32.xlu0 %v1131
        %v1133 = vpop.xlane.xlu0 %1132
        %v1134 = vadd.f32 %v1041, %v1042
        %1135 = vadd.xlane.f32.xlu0 %v1134
        %v1136 = vpop.xlane.xlu0 %1135
        %v1137 = vadd.f32 %v1043, %v1044
        %1138 = vadd.xlane.f32.xlu0 %v1137
        %v1139 = vpop.xlane.xlu0 %1138
        %v1140 = vadd.f32 %v1045, %v1046
        %1141 = vadd.xlane.f32.xlu0 %v1140
        %v1142 = vpop.xlane.xlu0 %1141
        %v1143 = vrcp.pop %v1049
        %v1144 = vrcp.pop %v1052
        %v1145 = vrcp.pop %v1055
        %v1146 = vrcp.pop %v1058
        %v1147 = vrcp.pop %v1061
        %v1148 = vrcp.pop %v1064
        %v1149 = vrcp.pop %v1067
        %v1150 = vrcp.pop %v1070
        %v1151 = vrcp.pop %v1073
        %v1152 = vrcp.pop %v1076
        %v1153 = vrcp.pop %v1079
        %v1154 = vrcp.pop %v1082
        %v1155 = vrcp.pop %v1085
        %v1156 = vrcp.pop %v1088
        %v1157 = vrcp.pop %v1091
        %v1158 = vrcp.pop %v1094
        %v1159 = vrcp.pop %v1097
        %v1160 = vrcp.pop %v1100
        %v1161 = vrcp.pop %v1103
        %v1162 = vrcp.pop %v1106
        %v1163 = vrcp.pop %v1109
        %v1164 = vrcp.pop %v1112
        %v1165 = vrcp.pop %v1115
        %v1166 = vrcp.pop %v1118
        %v1167 = vrcp.pop %v1121
        %v1168 = vrcp.pop %v1124
        %v1169 = vrcp.pop %v1127
        %v1170 = vrcp.pop %v1130
        %v1171 = vrcp.pop %v1133
        %v1172 = vrcp.pop %v1136
        %v1173 = vrcp.pop %v1139
        %v1174 = vrcp.pop %v1142
        %v1175 = vmul.f32 %v983, %v1143
        %v1176 = vmul.f32 %v984, %v1143
        %v1177 = vmul.f32 %v985, %v1144
        %v1178 = vmul.f32 %v986, %v1144
        %v1179 = vmul.f32 %v987, %v1145
        %v1180 = vmul.f32 %v988, %v1145
        %v1181 = vmul.f32 %v989, %v1146
        %v1182 = vmul.f32 %v990, %v1146
        %v1183 = vmul.f32 %v991, %v1147
        %v1184 = vmul.f32 %v992, %v1147
        %v1185 = vmul.f32 %v993, %v1148
        %v1186 = vmul.f32 %v994, %v1148
        %v1187 = vmul.f32 %v995, %v1149
        %v1188 = vmul.f32 %v996, %v1149
        %v1189 = vmul.f32 %v997, %v1150
        %v1190 = vmul.f32 %v998, %v1150
        %v1191 = vmul.f32 %v999, %v1151
        %v1192 = vmul.f32 %v1000, %v1151
        %v1193 = vmul.f32 %v1001, %v1152
        %v1194 = vmul.f32 %v1002, %v1152
        %v1195 = vmul.f32 %v1003, %v1153
        %v1196 = vmul.f32 %v1004, %v1153
        %v1197 = vmul.f32 %v1005, %v1154
        %v1198 = vmul.f32 %v1006, %v1154
        %v1199 = vmul.f32 %v1007, %v1155
        %v1200 = vmul.f32 %v1008, %v1155
        %v1201 = vmul.f32 %v1009, %v1156
        %v1202 = vmul.f32 %v1010, %v1156
        %v1203 = vmul.f32 %v1011, %v1157
        %v1204 = vmul.f32 %v1012, %v1157
        %v1205 = vmul.f32 %v1013, %v1158
        %v1206 = vmul.f32 %v1014, %v1158
        %v1207 = vmul.f32 %v1015, %v1159
        %v1208 = vmul.f32 %v1016, %v1159
        %v1209 = vmul.f32 %v1017, %v1160
        %v1210 = vmul.f32 %v1018, %v1160
        %v1211 = vmul.f32 %v1019, %v1161
        %v1212 = vmul.f32 %v1020, %v1161
        %v1213 = vmul.f32 %v1021, %v1162
        %v1214 = vmul.f32 %v1022, %v1162
        %v1215 = vmul.f32 %v1023, %v1163
        %v1216 = vmul.f32 %v1024, %v1163
        %v1217 = vmul.f32 %v1025, %v1164
        %v1218 = vmul.f32 %v1026, %v1164
        %v1219 = vmul.f32 %v1027, %v1165
        %v1220 = vmul.f32 %v1028, %v1165
        %v1221 = vmul.f32 %v1029, %v1166
        %v1222 = vmul.f32 %v1030, %v1166
        %v1223 = vmul.f32 %v1031, %v1167
        %v1224 = vmul.f32 %v1032, %v1167
        %v1225 = vmul.f32 %v1033, %v1168
        %v1226 = vmul.f32 %v1034, %v1168
        %v1227 = vmul.f32 %v1035, %v1169
        %v1228 = vmul.f32 %v1036, %v1169
        %v1229 = vmul.f32 %v1037, %v1170
        %v1230 = vmul.f32 %v1038, %v1170
        %v1231 = vmul.f32 %v1039, %v1171
        %v1232 = vmul.f32 %v1040, %v1171
        %v1233 = vmul.f32 %v1041, %v1172
        %v1234 = vmul.f32 %v1042, %v1172
        %v1235 = vmul.f32 %v1043, %v1173
        %v1236 = vmul.f32 %v1044, %v1173
        %v1237 = vmul.f32 %v1045, %v1174
        %v1238 = vmul.f32 %v1046, %v1174
        %v1239 = vpack.c.bf16 %v1177, %v1175
        %v1240 = vpack.c.bf16 %v1178, %v1176
        %v1241 = vpack.c.bf16 %v1181, %v1179
        %v1242 = vpack.c.bf16 %v1182, %v1180
        %v1243 = vpack.c.bf16 %v1185, %v1183
        %v1244 = vpack.c.bf16 %v1186, %v1184
        %v1245 = vpack.c.bf16 %v1189, %v1187
        %v1246 = vpack.c.bf16 %v1190, %v1188
        %v1247 = vpack.c.bf16 %v1193, %v1191
        %v1248 = vpack.c.bf16 %v1194, %v1192
        %v1249 = vpack.c.bf16 %v1197, %v1195
        %v1250 = vpack.c.bf16 %v1198, %v1196
        %v1251 = vpack.c.bf16 %v1201, %v1199
        %v1252 = vpack.c.bf16 %v1202, %v1200
        %v1253 = vpack.c.bf16 %v1205, %v1203
        %v1254 = vpack.c.bf16 %v1206, %v1204
        %v1255 = vpack.c.bf16 %v1209, %v1207
        %v1256 = vpack.c.bf16 %v1210, %v1208
        %v1257 = vpack.c.bf16 %v1213, %v1211
        %v1258 = vpack.c.bf16 %v1214, %v1212
        %v1259 = vpack.c.bf16 %v1217, %v1215
        %v1260 = vpack.c.bf16 %v1218, %v1216
        %v1261 = vpack.c.bf16 %v1221, %v1219
        %v1262 = vpack.c.bf16 %v1222, %v1220
        %v1263 = vpack.c.bf16 %v1225, %v1223
        %v1264 = vpack.c.bf16 %v1226, %v1224
        %v1265 = vpack.c.bf16 %v1229, %v1227
        %v1266 = vpack.c.bf16 %v1230, %v1228
        %v1267 = vpack.c.bf16 %v1233, %v1231
        %v1268 = vpack.c.bf16 %v1234, %v1232
        %v1269 = vpack.c.bf16 %v1237, %v1235
        %v1270 = vpack.c.bf16 %v1238, %v1236
        %v1271 = vld [vmem:[%s282] sm:$0xff]
        %v1272 = vld [vmem:[%s282 + $0x8] sm:$0xff]
        %v1273 = vld [vmem:[%s282 + $0x10] sm:$0xff]
        %v1274 = vld [vmem:[%s282 + $0x18] sm:$0xff]
        %v1275 = vpack.c.bf16 %v400, %v394
        %v1276 = vpack.c.bf16 %v402, %v396
        %1277 = vmatprep.subr.bf16.mxu0 %v1254
        %1278 = vmatpush1.bf16.msra.mxu0 %v1253
        %1279 = vmatprep.subr.bf16.mxu0 %v1252
        %1280 = vmatpush1.bf16.msra.mxu0 %v1251
        %1281 = vmatprep.subr.bf16.mxu0 %v1250
        %1282 = vmatpush1.bf16.msra.mxu0 %v1249
        %1283 = vmatprep.subr.bf16.mxu0 %v1248
        %1284 = vmatpush1.bf16.msra.mxu0 %v1247
        %1285 = vmatprep.subr.bf16.mxu0 %v1246
        %1286 = vmatpush1.bf16.msra.mxu0 %v1245
        %1287 = vmatprep.subr.bf16.mxu0 %v1244
        %1288 = vmatpush1.bf16.msra.mxu0 %v1243
        %1289 = vmatprep.subr.bf16.mxu0 %v1242
        %1290 = vmatpush1.bf16.msra.mxu0 %v1241
        %1291 = vmatprep.subr.bf16.mxu0 %v1240
        %1292 = vmatpush1.bf16.msra.mxu0 %v1239
        %1293 = vmatprep.subr.bf16.mxu0 %v1270
        %1294 = vmatpush2.bf16.msra.mxu0 %v1269
        %1295 = vmatprep.subr.bf16.mxu0 %v1268
        %1296 = vmatpush2.bf16.msra.mxu0 %v1267
        %1297 = vmatprep.subr.bf16.mxu0 %v1266
        %1298 = vmatpush2.bf16.msra.mxu0 %v1265
        %1299 = vmatprep.subr.bf16.mxu0 %v1264
        %1300 = vmatpush2.bf16.msra.mxu0 %v1263
        %1301 = vmatprep.subr.bf16.mxu0 %v1262
        %1302 = vmatpush2.bf16.msra.mxu0 %v1261
        %1303 = vmatprep.subr.bf16.mxu0 %v1260
        %1304 = vmatpush2.bf16.msra.mxu0 %v1259
        %1305 = vmatprep.subr.bf16.mxu0 %v1258
        %1306 = vmatpush2.bf16.msra.mxu0 %v1257
        %1307 = vmatprep.subr.bf16.mxu0 %v1256
        %1308 = vmatpush2.bf16.msra.mxu0 %v1255
        %1309 = vmatprep.mubr.bf16.mxu0 %v1276
        %1310 = vmatmul.mubr.bf16.gmra.mxu0 %v1275
        %v1311 = vpop.f32.mrf.mxu0
        %v1312 = vadd.f32 0.0, %v1311
        %v1313 = vpop.f32.mrf.mxu0
        %v1314 = vadd.f32 0.0, %v1313
        %v1315 = vpop.f32.mrf.mxu0
        %v1316 = vadd.f32 0.0, %v1315
        %v1317 = vpop.f32.mrf.mxu0
        %v1318 = vadd.f32 0.0, %v1317
        %1319 = vdwg.mxu0
        %v1320 = vadd.f32 %v1271, %v1312
        %v1321 = vadd.f32 %v1272, %v1314
        %v1322 = vadd.f32 %v1273, %v1316
        %v1323 = vadd.f32 %v1274, %v1318
        %1324 = vst [vmem:[%s282] sm:$0xff] %v1320
        %1325 = vst [vmem:[%s282 + $0x8] sm:$0xff] %v1321
        %1326 = vst [vmem:[%s282 + $0x10] sm:$0xff] %v1322
        %1327 = vst [vmem:[%s282 + $0x18] sm:$0xff] %v1323
        // Predicated region
        $region49: #{tpu_custom_call.1} parent=43 // pred_check
          %p1328 = pneg %p299
        $region50: #{tpu_custom_call.1} parent=43 // pred_check_branch
          %1330 = sbr.rel (%p1328) target = $region52
        $region51: #{tpu_custom_call.1} parent=43 // pred_region
          %v1331 = vld [vmem:[%s4] sm:$0xff]
          %v1332 = vld [vmem:[%s4 + $0x8] sm:$0xff]
          %v1333 = vld [vmem:[%s282] sm:$0xff]
          %v1334 = vld [vmem:[%s282 + $0x8] sm:$0xff]
          %v1335 = vld [vmem:[%s282 + $0x10] sm:$0xff]
          %v1336 = vld [vmem:[%s282 + $0x18] sm:$0xff]
          %v1337 = vld [vmem:[%s5] sm:$0xff]
          %v1338 = vld [vmem:[%s5 + $0x8] sm:$0xff]
          %1340 = vset.pattern.permute.xlu0 0
          %1341 = vperm.xlu0 %1340, %v1337
          %v1342 = vpop.permute.xlu0 %1341
          %1345 = vset.pattern.permute.xlu0 0
          %1346 = vperm.xlu0 %1345, %v1338
          %v1347 = vpop.permute.xlu0 %1346
          %v1350 = vsel %vm348, %v1331, 0
          %v1353 = vsel %vm348, %v1332, 0
          %1355 = vmatprep.subr.mxu0 0.0
          %1356 = vmatpush1.msra.mxu0 0.0
          %1357 = vmatprep.subr.mxu0 0.0
          %1358 = vmatpush1.msra.mxu0 0.0
          %1359 = vmatprep.subr.mxu0 0.0
          %1360 = vmatpush1.msra.mxu0 0.0
          %1361 = vmatprep.subr.mxu0 0.0
          %1362 = vmatpush1.msra.mxu0 0.0
          %1363 = vmatprep.subr.mxu0 0.0
          %1364 = vmatpush1.msra.mxu0 0.0
          %1365 = vmatprep.subr.mxu0 0.0
          %1366 = vmatpush1.msra.mxu0 0.0
          %1367 = vmatprep.subr.mxu0 0.0
          %1368 = vmatpush1.msra.mxu0 0.0
          %1369 = vmatprep.subr.mxu0 0.0
          %1370 = vmatpush1.msra.mxu0 0.0
          %1371 = vmatprep.subr.mxu0 0.0
          %1372 = vmatpush1.msra.mxu0 0.0
          %1373 = vmatprep.subr.mxu0 0.0
          %1374 = vmatpush1.msra.mxu0 0.0
          %1375 = vmatprep.subr.mxu0 0.0
          %1376 = vmatpush1.msra.mxu0 0.0
          %1377 = vmatprep.subr.mxu0 0.0
          %1378 = vmatpush1.msra.mxu0 0.0
          %1379 = vmatprep.subr.mxu0 0.0
          %1380 = vmatpush1.msra.mxu0 0.0
          %1381 = vmatprep.subr.mxu0 0.0
          %1382 = vmatpush1.msra.mxu0 0.0
          %1383 = vmatprep.subr.mxu0 %v1336
          %1384 = vmatpush1.msra.mxu0 %v1335
          %1385 = vmatprep.subr.mxu0 %v1334
          %1386 = vmatpush1.msra.mxu0 %v1333
          %1387 = vmatprep.subr.mxu0 0.0
          %1388 = vmatpush2.msra.mxu0 0.0
          %1389 = vmatprep.subr.mxu0 0.0
          %1390 = vmatpush2.msra.mxu0 0.0
          %1391 = vmatprep.subr.mxu0 0.0
          %1392 = vmatpush2.msra.mxu0 0.0
          %1393 = vmatprep.subr.mxu0 0.0
          %1394 = vmatpush2.msra.mxu0 0.0
          %1395 = vmatprep.subr.mxu0 0.0
          %1396 = vmatpush2.msra.mxu0 0.0
          %1397 = vmatprep.subr.mxu0 0.0
          %1398 = vmatpush2.msra.mxu0 0.0
          %1399 = vmatprep.subr.mxu0 0.0
          %1400 = vmatpush2.msra.mxu0 0.0
          %1401 = vmatprep.subr.mxu0 0.0
          %1402 = vmatpush2.msra.mxu0 0.0
          %1403 = vmatprep.subr.mxu0 0.0
          %1404 = vmatpush2.msra.mxu0 0.0
          %1405 = vmatprep.subr.mxu0 0.0
          %1406 = vmatpush2.msra.mxu0 0.0
          %1407 = vmatprep.subr.mxu0 0.0
          %1408 = vmatpush2.msra.mxu0 0.0
          %1409 = vmatprep.subr.mxu0 0.0
          %1410 = vmatpush2.msra.mxu0 0.0
          %1411 = vmatprep.subr.mxu0 0.0
          %1412 = vmatpush2.msra.mxu0 0.0
          %1413 = vmatprep.subr.mxu0 0.0
          %1414 = vmatpush2.msra.mxu0 0.0
          %1415 = vmatprep.subr.mxu0 0.0
          %1416 = vmatpush2.msra.mxu0 0.0
          %1417 = vmatprep.subr.mxu0 0.0
          %1418 = vmatpush2.msra.mxu0 0.0
          %1419 = vmatprep.mubr.f32.mxu0 0.0
          %1420 = vmatmul.mubr.f32.gmra.mxu0 %v1350
          %v1421 = vpop.f32.mrf.mxu0
          %v1422 = vadd.f32 %v1342, %v1421
          %v1423 = vpop.f32.mrf.mxu0
          %v1424 = vadd.f32 %v1342, %v1423
          %1425 = vmatprep.mubr.f32.mxu0 0.0
          %1426 = vmatmul.mubr.f32.gmra.mxu0 %v1353
          %v1427 = vpop.f32.mrf.mxu0
          %v1428 = vadd.f32 %v1347, %v1427
          %v1429 = vpop.f32.mrf.mxu0
          %v1430 = vadd.f32 %v1347, %v1429
          %1431 = vdwg.mxu0
          %1432 = vst [vmem:[%s282] sm:$0xff] %v1422
          %1433 = vst [vmem:[%s282 + $0x8] sm:$0xff] %v1424
          %1434 = vst [vmem:[%s282 + $0x10] sm:$0xff] %v1428
          %1435 = vst [vmem:[%s282 + $0x18] sm:$0xff] %v1430
        $region52: #{tpu_custom_call.1} parent=43 // pred_fallthru
          _
        %s1436 = sand.u32 %s178, 1
        %s1437 = scalar_lea.sflag [#allocation3], %s1436
        %s1438 = sand.u32 %s178, 1
        %s1439 = smul.addr %s1438, 32
        %s1440 = scalar_lea.vmem [#allocation2], %s1439
        // Predicated region
        $region53: #{tpu_custom_call.1} parent=43 // pred_check
          %p1441 = pneg %p188
        $region54: #{tpu_custom_call.1} parent=43 // pred_check_branch
          %1443 = sbr.rel (%p1441) target = $region56
        $region55: #{tpu_custom_call.1} parent=43 // pred_region
          %s1445 = ssub.s32 512, 512
          %1446 = vsyncadd %s1437, %s1445
          %s1447 = smul.addr %s24, 4
          %s1448 = smul.addr %s1447, 128
          %s1449 = scalar_lea.hbm %s6, %s1448
          %s1450 = sshll.u32 %s1440, 4
          %s1451 = int_to_ptr.vmem [resolvable:$true] %s1450
          %1456 = dma.vmem_to_hbm [thread:$0]  %s1451, 512, %s1449, %s1437, 256, 256, 16
        $region56: #{tpu_custom_call.1} parent=43 // pred_fallthru
          _
      $region44: #{tpu_custom_call.1} parent=5 // pred_fallthru
        _
      %p1457 = scmp.le.s32.totalorder 2, %s15
      // Predicated region
      $region57: #{tpu_custom_call.1} parent=5 // pred_check
        %p1458 = pneg %p1457
      $region58: #{tpu_custom_call.1} parent=5 // pred_check_branch
        %1460 = sbr.rel (%p1458) target = $region60
      $region59: #{tpu_custom_call.1} parent=5 // pred_region
        %s1461 = ssub.s32 %s15, 2
        // Predicated region
        $region61: #{tpu_custom_call.1} parent=59 // pred_check
          %p1462 = pneg %p194
        $region62: #{tpu_custom_call.1} parent=59 // pred_check_branch
          %1464 = sbr.rel (%p1462) target = $region64
        $region63: #{tpu_custom_call.1} parent=59 // pred_region
          %s1465 = sand.u32 %s179, 1
          %s1466 = scalar_lea.sflag [#allocation3], %s1465
          %s1467 = sand.u32 %s179, 1
          %s1468 = smul.addr %s1467, 32
          %s1469 = scalar_lea.vmem [#allocation2], %s1468
          %1470 = dma.done %s1466, 512
        $region64: #{tpu_custom_call.1} parent=59 // pred_fallthru
          _
      $region60: #{tpu_custom_call.1} parent=5 // pred_fallthru
        _
    $region6: #{tpu_custom_call.1} parent=1 // loop_footer
      %s19 = sadd.s32 1, %s15
    $region7: #{tpu_custom_call.1} parent=1 // loop_footer_branch
      %14 = sbr.rel target = $region3
    $region8: #{tpu_custom_call.1} parent=1 // loop_exit
      _
    %1471 = vsyncpa [#allocation3], 1
    %s1472 = scalar_lea.sflag [#allocation3], 1
    %1473 = vsyncpa %s1472, 1

</llo_original>
